<compile_context>
chip_gen: v7x
topology: tpu7x:2x2x1
jax: 0.10.0
libtpu: 0.0.40
codegen_flags: <defaults>
</compile_context>

<pallas_src>
import math

import jax
import jax.numpy as jnp
from jax.experimental import pallas as pl
from jax.experimental.pallas import tpu as pltpu


def _shard_batch_over_cores():
    # v7x has 2 TensorCores per chip: shard the independent batch across them.
    # On v5e/v6e (single TC) extra grid steps are pure overhead, so keep B
    # resident in one invocation there.
    try:
        kind = jax.devices()[0].device_kind.lower().replace(" ", "")
        return ("v7" in kind) or ("tpu7" in kind)
    except Exception:
        return False


_BATCH_PARALLEL = _shard_batch_over_cores()


# --------------------------------------------------------------------------
# Fused kernel: GRU recurrence + masked self-attention + masked cross-attn.
# --------------------------------------------------------------------------
def fused_decoder_kernel(tgt_ref, h0_ref, src_ref, mbias_ref, w_ref, b_ref,
                         o_ref):
    # tgt_ref:   [Bb, Tt, D]       bf16  decoder inputs
    # h0_ref:    [Bb, 1, H]        f32   GRU initial hidden state
    # src_ref:   [Bb, Ts, H]       bf16  encoder outputs
    # mbias_ref: [Bb, Tt, Tt+Ts]   f32   additive mask bias (0 / -1e30);
    #                                    cols [:Tt] self-attn, [Tt:] cross-attn
    # w_ref:     [D+H, 3H]         bf16  rows [:D] = W_ih, rows [D:] = W_hh,
    #                                    gate order (r, z, n) along lanes
    # b_ref:     [2, 3H]           f32   row0 = (b_ih_r+b_hh_r, b_ih_z+b_hh_z,
    #                                    b_ih_n); row1 = (0, 0, b_hh_n)
    # o_ref:     [Bb, Tt, H]       f32   output
    f32, bf16 = jnp.float32, jnp.bfloat16
    Bb, Tt, D = tgt_ref.shape
    H = h0_ref.shape[-1]

    w = w_ref[...]                                   # [D+H, 3H] bf16
    wih = w[:D, :]                                   # [D, 3H]
    whh = w[D:, :]                                   # [H, 3H]
    b_gi = b_ref[0:1, :]                             # [1, 3H] f32
    b_hn = b_ref[1:2, :]                             # [1, 3H] f32 (n lanes only)

    # ---- GRU input projections for all timesteps in one matmul -------------
    x = tgt_ref[...].reshape(Bb * Tt, D)             # bf16
    gi = jnp.dot(x, wih, preferred_element_type=f32) + b_gi
    gi = gi.reshape(Bb, Tt, 3 * H)                   # [Bb, Tt, 3H] f32

    # ---- GRU recurrence, fully unrolled, one [H,3H] matmul per step --------
    h = h0_ref[...].reshape(Bb, H)                   # [Bb, H] f32
    hs = []
    for t in range(Tt):
        gh = jnp.dot(h.astype(bf16), whh, preferred_element_type=f32) + b_hn
        g = gi[:, t, :]                              # [Bb, 3H]
        rz = jax.nn.sigmoid(g[:, :2 * H] + gh[:, :2 * H])
        r = rz[:, :H]
        z = rz[:, H:]
        n = jnp.tanh(g[:, 2 * H:] + r * gh[:, 2 * H:])
        h = (1.0 - z) * n + z * h
        hs.append(h)
    y = jnp.stack(hs, axis=1)                        # [Bb, Tt, H] f32

    # ---- masked scaled-dot-product attention (self, then cross) ------------
    inv_sqrt_h = 1.0 / math.sqrt(H)
    mbias = mbias_ref[...]                           # [Bb, Tt, Tt+Ts] f32

    def masked_attn(kv_bf16, target_f32, bias):
        q = (target_f32 * inv_sqrt_h).astype(bf16)   # fold 1/sqrt(H) into q
        s = jnp.einsum("bth,bsh->bts", q, kv_bf16,
                       preferred_element_type=f32) + bias
        s = s - jnp.max(s, axis=-1, keepdims=True)
        p = jnp.exp(s)
        p = p * pl.reciprocal(jnp.sum(p, axis=-1, keepdims=True), approx=True)
        return jnp.einsum("bts,bsh->bth", p.astype(bf16), kv_bf16,
                          preferred_element_type=f32)

    y = masked_attn(y.astype(bf16), y, mbias[:, :, :Tt])    # t_attn  (self)
    y = masked_attn(src_ref[...], y, mbias[:, :, Tt:])      # st_attn (cross)
    o_ref[...] = y.astype(o_ref.dtype)


# --------------------------------------------------------------------------
# Wrapper: single pallas_call for the whole decoder layer.
# --------------------------------------------------------------------------
@jax.jit
def attention_decoder_layer(src, tgt, state, tgt_mask, src_tgt_mask, params):
    # src:  [B, Ts, H]   encoder outputs
    # tgt:  [B, Tt, D]   decoder inputs
    # state:[1, B, H]    GRU initial hidden state
    B, Tt, D = tgt.shape
    _, Ts, H = src.shape
    f32, bf16 = jnp.float32, jnp.bfloat16

    wih, whh = params["wih"], params["whh"]          # [3, D, H], [3, H, H]
    bih, bhh = params["bih"], params["bhh"]          # [3, 1, H], [3, 1, H]

    # Pack per-gate weights along the output (lane) dim; stack W_ih over W_hh.
    w = jnp.concatenate(
        [jnp.concatenate([wih[0], wih[1], wih[2]], axis=-1),   # [D, 3H]
         jnp.concatenate([whh[0], whh[1], whh[2]], axis=-1)],  # [H, 3H]
        axis=0).astype(bf16)                                   # [D+H, 3H]
    # row0: bias folded into the input projection; row1: b_hh_n (mult. by r).
    b = jnp.concatenate(
        [jnp.concatenate([bih[0] + bhh[0], bih[1] + bhh[1], bih[2]], axis=-1),
         jnp.concatenate([jnp.zeros((1, 2 * H), f32), bhh[2]], axis=-1)],
        axis=0).astype(f32)                                    # [2, 3H]

    # Additive mask biases, concatenated into one operand.
    neg = jnp.float32(-1e30)
    mbias = jnp.concatenate(
        [jnp.where(tgt_mask != 0, 0.0, neg),
         jnp.where(src_tgt_mask != 0, 0.0, neg)],
        axis=-1).astype(f32)                                   # [B, Tt, Tt+Ts]

    tgt_b = tgt.astype(bf16)
    src_b = src.astype(bf16)
    h0 = state[0][:, None, :]                                  # [B, 1, H] f32

    bb = 1 if (_BATCH_PARALLEL and B > 1) else B               # batch block
    grid = (B // bb,)

    return pl.pallas_call(
        fused_decoder_kernel,
        out_shape=jax.ShapeDtypeStruct((B, Tt, H), f32),
        grid=grid,
        in_specs=[
            pl.BlockSpec((bb, Tt, D), lambda i: (i, 0, 0)),        # tgt
            pl.BlockSpec((bb, 1, H), lambda i: (i, 0, 0)),         # h0
            pl.BlockSpec((bb, Ts, H), lambda i: (i, 0, 0)),        # src
            pl.BlockSpec((bb, Tt, Tt + Ts), lambda i: (i, 0, 0)),  # mask bias
            pl.BlockSpec((D + H, 3 * H), lambda i: (0, 0)),        # weights
            pl.BlockSpec((2, 3 * H), lambda i: (0, 0)),            # biases
        ],
        out_specs=pl.BlockSpec((bb, Tt, H), lambda i: (i, 0, 0)),
        compiler_params=pltpu.CompilerParams(
            dimension_semantics=("parallel",)),
    )(tgt_b, h0, src_b, mbias, w, b)


# --------------------------------------------------------------------------
# Pure-JAX float32 reference (same semantics) for sanity checking.
# --------------------------------------------------------------------------
def reference_forward(src, tgt, state, tgt_mask, src_tgt_mask, p):
    B, Tt, D = tgt.shape
    H = state.shape[-1]
    wih, whh, bih, bhh = p["wih"], p["whh"], p["bih"], p["bhh"]
    h = state[0]
    ys = []
    for t in range(Tt):
        xt = tgt[:, t, :]
        r = jax.nn.sigmoid(xt @ wih[0] + bih[0] + h @ whh[0] + bhh[0])
        z = jax.nn.sigmoid(xt @ wih[1] + bih[1] + h @ whh[1] + bhh[1])
        n = jnp.tanh(xt @ wih[2] + bih[2] + r * (h @ whh[2] + bhh[2]))
        h = (1.0 - z) * n + z * h
        ys.append(h)
    y = jnp.stack(ys, axis=1)                                  # [B, Tt, H]

    def attn(source, target, mask):
        s = jnp.einsum("bth,bsh->bts", target, source) / jnp.sqrt(jnp.float32(H))
        s = jnp.where(mask != 0, s, -1e30)
        pm = jax.nn.softmax(s, axis=-1)
        return jnp.einsum("bts,bsh->bth", pm, source)

    y = attn(y, y, tgt_mask)
    return attn(src, y, src_tgt_mask)


if __name__ == "__main__":
    B, D, H, Tt, Ts = 2, 4, 32, 8, 8     # batch, depth, hidden_dim, tgt/src seq
    key = jax.random.PRNGKey(0)
    ks = jax.random.split(key, 8)

    # PyTorch nn.GRU init: U(-1/sqrt(H), 1/sqrt(H)); gate order (r, z, n).
    bound = 1.0 / math.sqrt(H)
    params = {
        "wih": jax.random.uniform(ks[0], (3, D, H), jnp.float32, -bound, bound),
        "whh": jax.random.uniform(ks[1], (3, H, H), jnp.float32, -bound, bound),
        "bih": jax.random.uniform(ks[2], (3, 1, H), jnp.float32, -bound, bound),
        "bhh": jax.random.uniform(ks[3], (3, 1, H), jnp.float32, -bound, bound),
    }

    src = jax.random.normal(ks[4], (B, Ts, H), jnp.float32)      # encoder outputs
    tgt = jax.random.normal(ks[5], (B, Tt, D), jnp.float32)      # decoder inputs
    state = jax.random.normal(ks[6], (1, B, H), jnp.float32)     # GRU h0

    # causal self-attention mask + cross mask hiding the last source position
    tgt_mask = jnp.tile(jnp.tril(jnp.ones((Tt, Tt), jnp.int32))[None], (B, 1, 1))
    src_tgt_mask = jnp.ones((B, Tt, Ts), jnp.int32).at[:, :, -1].set(0)

    out = attention_decoder_layer(src, tgt, state, tgt_mask, src_tgt_mask, params)
    out = jax.block_until_ready(out)
    assert out.shape == (B, Tt, H), out.shape

    ref = jax.block_until_ready(
        reference_forward(src, tgt, state, tgt_mask, src_tgt_mask, params))
    # bf16 MXU operands with f32 accumulation vs. pure-f32 reference.
    err = float(jnp.max(jnp.abs(out - ref)))
    assert jnp.allclose(out, ref, rtol=3e-2, atol=3e-2), err

    print("KERNEL_OK")
</pallas_src>

<mosaic_0001>
module attributes {stable_mosaic.version = 11 : i64} {
  func.func @fused_decoder_kernel(%arg0: i32, %arg1: memref<2x8x4xbf16, #tpu.memory_space<vmem>>, %arg2: memref<2x1x32xf32, #tpu.memory_space<vmem>>, %arg3: memref<2x8x32xbf16, #tpu.memory_space<vmem>>, %arg4: memref<2x8x16xf32, #tpu.memory_space<vmem>>, %arg5: memref<36x96xbf16, #tpu.memory_space<vmem>>, %arg6: memref<2x96xf32, #tpu.memory_space<vmem>>, %arg7: memref<2x8x32xf32, #tpu.memory_space<vmem>>) attributes {dimension_semantics = [#tpu.dimension_semantics<parallel>], iteration_bounds = array<i64: 1>, scalar_prefetch = 0 : i64, scratch_operands = 0 : i64, tpu.core_type = #tpu.core_type<tc>, window_params = [{transform_indices = @transform_0, window_bounds = array<i64: 2, 8, 4>}, {transform_indices = @transform_1, window_bounds = array<i64: 2, 1, 32>}, {transform_indices = @transform_2, window_bounds = array<i64: 2, 8, 32>}, {transform_indices = @transform_3, window_bounds = array<i64: 2, 8, 16>}, {pipeline_mode = #tpu.pipeline_mode<synchronous>, transform_indices = @transform_4, window_bounds = array<i64: 36, 96>}, {pipeline_mode = #tpu.pipeline_mode<synchronous>, transform_indices = @transform_5, window_bounds = array<i64: 2, 96>}, {transform_indices = @transform_6, window_bounds = array<i64: 2, 8, 32>}]} {
    %c0 = arith.constant 0 : index
    %c0_0 = arith.constant 0 : index
    %0 = vector.load %arg5[%c0, %c0_0] : memref<36x96xbf16, #tpu.memory_space<vmem>>, vector<36x96xbf16>
    %1 = vector.extract_strided_slice %0 {offsets = [0, 0], sizes = [4, 96], strides = [1, 1]} : vector<36x96xbf16> to vector<4x96xbf16>
    %2 = vector.extract_strided_slice %0 {offsets = [4, 0], sizes = [32, 96], strides = [1, 1]} : vector<36x96xbf16> to vector<32x96xbf16>
    %c0_1 = arith.constant 0 : index
    %c0_2 = arith.constant 0 : index
    %3 = vector.load %arg6[%c0_1, %c0_2] : memref<2x96xf32, #tpu.memory_space<vmem>>, vector<1x96xf32>
    %c1 = arith.constant 1 : index
    %c0_3 = arith.constant 0 : index
    %4 = vector.load %arg6[%c1, %c0_3] : memref<2x96xf32, #tpu.memory_space<vmem>>, vector<1x96xf32>
    %c0_4 = arith.constant 0 : index
    %c0_5 = arith.constant 0 : index
    %c0_6 = arith.constant 0 : index
    %5 = vector.load %arg1[%c0_4, %c0_5, %c0_6] : memref<2x8x4xbf16, #tpu.memory_space<vmem>>, vector<2x8x4xbf16>
    %6 = vector.shape_cast %5 : vector<2x8x4xbf16> to vector<16x4xbf16>
    %cst = arith.constant dense<0.000000e+00> : vector<16x96xf32>
    %7 = tpu.matmul %6, %1, %cst {dimension_numbers = #tpu.dot_dimension_numbers<[1], [0], [0], [1], [0, 0, 1, 1], [], []>} : vector<16x4xbf16>, vector<4x96xbf16>, vector<16x96xf32> -> vector<16x96xf32>
    %8 = vector.broadcast %3 : vector<1x96xf32> to vector<16x96xf32>
    %9 = arith.addf %7, %8 : vector<16x96xf32>
    %10 = vector.shape_cast %9 : vector<16x96xf32> to vector<2x8x96xf32>
    %c0_7 = arith.constant 0 : index
    %c0_8 = arith.constant 0 : index
    %c0_9 = arith.constant 0 : index
    %11 = vector.load %arg2[%c0_7, %c0_8, %c0_9] : memref<2x1x32xf32, #tpu.memory_space<vmem>>, vector<2x1x32xf32>
    %12 = vector.shape_cast %11 : vector<2x1x32xf32> to vector<2x32xf32>
    %13 = arith.truncf %12 : vector<2x32xf32> to vector<2x32xbf16>
    %cst_10 = arith.constant dense<0.000000e+00> : vector<2x96xf32>
    %14 = tpu.matmul %13, %2, %cst_10 {dimension_numbers = #tpu.dot_dimension_numbers<[1], [0], [0], [1], [0, 0, 1, 1], [], []>} : vector<2x32xbf16>, vector<32x96xbf16>, vector<2x96xf32> -> vector<2x96xf32>
    %15 = vector.broadcast %4 : vector<1x96xf32> to vector<2x96xf32>
    %16 = arith.addf %14, %15 : vector<2x96xf32>
    %17 = vector.extract_strided_slice %10 {offsets = [0, 0, 0], sizes = [2, 1, 96], strides = [1, 1, 1]} : vector<2x8x96xf32> to vector<2x1x96xf32>
    %18 = vector.shape_cast %17 : vector<2x1x96xf32> to vector<2x96xf32>
    %19 = vector.extract_strided_slice %18 {offsets = [0, 0], sizes = [2, 64], strides = [1, 1]} : vector<2x96xf32> to vector<2x64xf32>
    %20 = vector.extract_strided_slice %16 {offsets = [0, 0], sizes = [2, 64], strides = [1, 1]} : vector<2x96xf32> to vector<2x64xf32>
    %21 = arith.addf %19, %20 : vector<2x64xf32>
    %22 = arith.negf %21 : vector<2x64xf32>
    %23 = math.exp %22 : vector<2x64xf32>
    %cst_11 = arith.constant 1.000000e+00 : f32
    %24 = vector.broadcast %cst_11 : f32 to vector<2x64xf32>
    %25 = arith.addf %24, %23 : vector<2x64xf32>
    %26 = arith.divf %24, %25 : vector<2x64xf32>
    %27 = vector.extract_strided_slice %26 {offsets = [0, 0], sizes = [2, 32], strides = [1, 1]} : vector<2x64xf32> to vector<2x32xf32>
    %28 = vector.extract_strided_slice %26 {offsets = [0, 32], sizes = [2, 32], strides = [1, 1]} : vector<2x64xf32> to vector<2x32xf32>
    %29 = vector.extract_strided_slice %18 {offsets = [0, 64], sizes = [2, 32], strides = [1, 1]} : vector<2x96xf32> to vector<2x32xf32>
    %30 = vector.extract_strided_slice %16 {offsets = [0, 64], sizes = [2, 32], strides = [1, 1]} : vector<2x96xf32> to vector<2x32xf32>
    %31 = arith.mulf %27, %30 : vector<2x32xf32>
    %32 = arith.addf %29, %31 : vector<2x32xf32>
    %33 = math.tanh %32 : vector<2x32xf32>
    %cst_12 = arith.constant 1.000000e+00 : f32
    %34 = vector.broadcast %cst_12 : f32 to vector<2x32xf32>
    %35 = arith.subf %34, %28 : vector<2x32xf32>
    %36 = arith.mulf %35, %33 : vector<2x32xf32>
    %37 = arith.mulf %28, %12 : vector<2x32xf32>
    %38 = arith.addf %36, %37 : vector<2x32xf32>
    %39 = arith.truncf %38 : vector<2x32xf32> to vector<2x32xbf16>
    %cst_13 = arith.constant dense<0.000000e+00> : vector<2x96xf32>
    %40 = tpu.matmul %39, %2, %cst_13 {dimension_numbers = #tpu.dot_dimension_numbers<[1], [0], [0], [1], [0, 0, 1, 1], [], []>} : vector<2x32xbf16>, vector<32x96xbf16>, vector<2x96xf32> -> vector<2x96xf32>
    %41 = vector.broadcast %4 : vector<1x96xf32> to vector<2x96xf32>
    %42 = arith.addf %40, %41 : vector<2x96xf32>
    %43 = vector.extract_strided_slice %10 {offsets = [0, 1, 0], sizes = [2, 1, 96], strides = [1, 1, 1]} : vector<2x8x96xf32> to vector<2x1x96xf32>
    %44 = vector.shape_cast %43 : vector<2x1x96xf32> to vector<2x96xf32>
    %45 = vector.extract_strided_slice %44 {offsets = [0, 0], sizes = [2, 64], strides = [1, 1]} : vector<2x96xf32> to vector<2x64xf32>
    %46 = vector.extract_strided_slice %42 {offsets = [0, 0], sizes = [2, 64], strides = [1, 1]} : vector<2x96xf32> to vector<2x64xf32>
    %47 = arith.addf %45, %46 : vector<2x64xf32>
    %48 = arith.negf %47 : vector<2x64xf32>
    %49 = math.exp %48 : vector<2x64xf32>
    %cst_14 = arith.constant 1.000000e+00 : f32
    %50 = vector.broadcast %cst_14 : f32 to vector<2x64xf32>
    %51 = arith.addf %50, %49 : vector<2x64xf32>
    %52 = arith.divf %50, %51 : vector<2x64xf32>
    %53 = vector.extract_strided_slice %52 {offsets = [0, 0], sizes = [2, 32], strides = [1, 1]} : vector<2x64xf32> to vector<2x32xf32>
    %54 = vector.extract_strided_slice %52 {offsets = [0, 32], sizes = [2, 32], strides = [1, 1]} : vector<2x64xf32> to vector<2x32xf32>
    %55 = vector.extract_strided_slice %44 {offsets = [0, 64], sizes = [2, 32], strides = [1, 1]} : vector<2x96xf32> to vector<2x32xf32>
    %56 = vector.extract_strided_slice %42 {offsets = [0, 64], sizes = [2, 32], strides = [1, 1]} : vector<2x96xf32> to vector<2x32xf32>
    %57 = arith.mulf %53, %56 : vector<2x32xf32>
    %58 = arith.addf %55, %57 : vector<2x32xf32>
    %59 = math.tanh %58 : vector<2x32xf32>
    %cst_15 = arith.constant 1.000000e+00 : f32
    %60 = vector.broadcast %cst_15 : f32 to vector<2x32xf32>
    %61 = arith.subf %60, %54 : vector<2x32xf32>
    %62 = arith.mulf %61, %59 : vector<2x32xf32>
    %63 = arith.mulf %54, %38 : vector<2x32xf32>
    %64 = arith.addf %62, %63 : vector<2x32xf32>
    %65 = arith.truncf %64 : vector<2x32xf32> to vector<2x32xbf16>
    %cst_16 = arith.constant dense<0.000000e+00> : vector<2x96xf32>
    %66 = tpu.matmul %65, %2, %cst_16 {dimension_numbers = #tpu.dot_dimension_numbers<[1], [0], [0], [1], [0, 0, 1, 1], [], []>} : vector<2x32xbf16>, vector<32x96xbf16>, vector<2x96xf32> -> vector<2x96xf32>
    %67 = vector.broadcast %4 : vector<1x96xf32> to vector<2x96xf32>
    %68 = arith.addf %66, %67 : vector<2x96xf32>
    %69 = vector.extract_strided_slice %10 {offsets = [0, 2, 0], sizes = [2, 1, 96], strides = [1, 1, 1]} : vector<2x8x96xf32> to vector<2x1x96xf32>
    %70 = vector.shape_cast %69 : vector<2x1x96xf32> to vector<2x96xf32>
    %71 = vector.extract_strided_slice %70 {offsets = [0, 0], sizes = [2, 64], strides = [1, 1]} : vector<2x96xf32> to vector<2x64xf32>
    %72 = vector.extract_strided_slice %68 {offsets = [0, 0], sizes = [2, 64], strides = [1, 1]} : vector<2x96xf32> to vector<2x64xf32>
    %73 = arith.addf %71, %72 : vector<2x64xf32>
    %74 = arith.negf %73 : vector<2x64xf32>
    %75 = math.exp %74 : vector<2x64xf32>
    %cst_17 = arith.constant 1.000000e+00 : f32
    %76 = vector.broadcast %cst_17 : f32 to vector<2x64xf32>
    %77 = arith.addf %76, %75 : vector<2x64xf32>
    %78 = arith.divf %76, %77 : vector<2x64xf32>
    %79 = vector.extract_strided_slice %78 {offsets = [0, 0], sizes = [2, 32], strides = [1, 1]} : vector<2x64xf32> to vector<2x32xf32>
    %80 = vector.extract_strided_slice %78 {offsets = [0, 32], sizes = [2, 32], strides = [1, 1]} : vector<2x64xf32> to vector<2x32xf32>
    %81 = vector.extract_strided_slice %70 {offsets = [0, 64], sizes = [2, 32], strides = [1, 1]} : vector<2x96xf32> to vector<2x32xf32>
    %82 = vector.extract_strided_slice %68 {offsets = [0, 64], sizes = [2, 32], strides = [1, 1]} : vector<2x96xf32> to vector<2x32xf32>
    %83 = arith.mulf %79, %82 : vector<2x32xf32>
    %84 = arith.addf %81, %83 : vector<2x32xf32>
    %85 = math.tanh %84 : vector<2x32xf32>
    %cst_18 = arith.constant 1.000000e+00 : f32
    %86 = vector.broadcast %cst_18 : f32 to vector<2x32xf32>
    %87 = arith.subf %86, %80 : vector<2x32xf32>
    %88 = arith.mulf %87, %85 : vector<2x32xf32>
    %89 = arith.mulf %80, %64 : vector<2x32xf32>
    %90 = arith.addf %88, %89 : vector<2x32xf32>
    %91 = arith.truncf %90 : vector<2x32xf32> to vector<2x32xbf16>
    %cst_19 = arith.constant dense<0.000000e+00> : vector<2x96xf32>
    %92 = tpu.matmul %91, %2, %cst_19 {dimension_numbers = #tpu.dot_dimension_numbers<[1], [0], [0], [1], [0, 0, 1, 1], [], []>} : vector<2x32xbf16>, vector<32x96xbf16>, vector<2x96xf32> -> vector<2x96xf32>
    %93 = vector.broadcast %4 : vector<1x96xf32> to vector<2x96xf32>
    %94 = arith.addf %92, %93 : vector<2x96xf32>
    %95 = vector.extract_strided_slice %10 {offsets = [0, 3, 0], sizes = [2, 1, 96], strides = [1, 1, 1]} : vector<2x8x96xf32> to vector<2x1x96xf32>
    %96 = vector.shape_cast %95 : vector<2x1x96xf32> to vector<2x96xf32>
    %97 = vector.extract_strided_slice %96 {offsets = [0, 0], sizes = [2, 64], strides = [1, 1]} : vector<2x96xf32> to vector<2x64xf32>
    %98 = vector.extract_strided_slice %94 {offsets = [0, 0], sizes = [2, 64], strides = [1, 1]} : vector<2x96xf32> to vector<2x64xf32>
    %99 = arith.addf %97, %98 : vector<2x64xf32>
    %100 = arith.negf %99 : vector<2x64xf32>
    %101 = math.exp %100 : vector<2x64xf32>
    %cst_20 = arith.constant 1.000000e+00 : f32
    %102 = vector.broadcast %cst_20 : f32 to vector<2x64xf32>
    %103 = arith.addf %102, %101 : vector<2x64xf32>
    %104 = arith.divf %102, %103 : vector<2x64xf32>
    %105 = vector.extract_strided_slice %104 {offsets = [0, 0], sizes = [2, 32], strides = [1, 1]} : vector<2x64xf32> to vector<2x32xf32>
    %106 = vector.extract_strided_slice %104 {offsets = [0, 32], sizes = [2, 32], strides = [1, 1]} : vector<2x64xf32> to vector<2x32xf32>
    %107 = vector.extract_strided_slice %96 {offsets = [0, 64], sizes = [2, 32], strides = [1, 1]} : vector<2x96xf32> to vector<2x32xf32>
    %108 = vector.extract_strided_slice %94 {offsets = [0, 64], sizes = [2, 32], strides = [1, 1]} : vector<2x96xf32> to vector<2x32xf32>
    %109 = arith.mulf %105, %108 : vector<2x32xf32>
    %110 = arith.addf %107, %109 : vector<2x32xf32>
    %111 = math.tanh %110 : vector<2x32xf32>
    %cst_21 = arith.constant 1.000000e+00 : f32
    %112 = vector.broadcast %cst_21 : f32 to vector<2x32xf32>
    %113 = arith.subf %112, %106 : vector<2x32xf32>
    %114 = arith.mulf %113, %111 : vector<2x32xf32>
    %115 = arith.mulf %106, %90 : vector<2x32xf32>
    %116 = arith.addf %114, %115 : vector<2x32xf32>
    %117 = arith.truncf %116 : vector<2x32xf32> to vector<2x32xbf16>
    %cst_22 = arith.constant dense<0.000000e+00> : vector<2x96xf32>
    %118 = tpu.matmul %117, %2, %cst_22 {dimension_numbers = #tpu.dot_dimension_numbers<[1], [0], [0], [1], [0, 0, 1, 1], [], []>} : vector<2x32xbf16>, vector<32x96xbf16>, vector<2x96xf32> -> vector<2x96xf32>
    %119 = vector.broadcast %4 : vector<1x96xf32> to vector<2x96xf32>
    %120 = arith.addf %118, %119 : vector<2x96xf32>
    %121 = vector.extract_strided_slice %10 {offsets = [0, 4, 0], sizes = [2, 1, 96], strides = [1, 1, 1]} : vector<2x8x96xf32> to vector<2x1x96xf32>
    %122 = vector.shape_cast %121 : vector<2x1x96xf32> to vector<2x96xf32>
    %123 = vector.extract_strided_slice %122 {offsets = [0, 0], sizes = [2, 64], strides = [1, 1]} : vector<2x96xf32> to vector<2x64xf32>
    %124 = vector.extract_strided_slice %120 {offsets = [0, 0], sizes = [2, 64], strides = [1, 1]} : vector<2x96xf32> to vector<2x64xf32>
    %125 = arith.addf %123, %124 : vector<2x64xf32>
    %126 = arith.negf %125 : vector<2x64xf32>
    %127 = math.exp %126 : vector<2x64xf32>
    %cst_23 = arith.constant 1.000000e+00 : f32
    %128 = vector.broadcast %cst_23 : f32 to vector<2x64xf32>
    %129 = arith.addf %128, %127 : vector<2x64xf32>
    %130 = arith.divf %128, %129 : vector<2x64xf32>
    %131 = vector.extract_strided_slice %130 {offsets = [0, 0], sizes = [2, 32], strides = [1, 1]} : vector<2x64xf32> to vector<2x32xf32>
    %132 = vector.extract_strided_slice %130 {offsets = [0, 32], sizes = [2, 32], strides = [1, 1]} : vector<2x64xf32> to vector<2x32xf32>
    %133 = vector.extract_strided_slice %122 {offsets = [0, 64], sizes = [2, 32], strides = [1, 1]} : vector<2x96xf32> to vector<2x32xf32>
    %134 = vector.extract_strided_slice %120 {offsets = [0, 64], sizes = [2, 32], strides = [1, 1]} : vector<2x96xf32> to vector<2x32xf32>
    %135 = arith.mulf %131, %134 : vector<2x32xf32>
    %136 = arith.addf %133, %135 : vector<2x32xf32>
    %137 = math.tanh %136 : vector<2x32xf32>
    %cst_24 = arith.constant 1.000000e+00 : f32
    %138 = vector.broadcast %cst_24 : f32 to vector<2x32xf32>
    %139 = arith.subf %138, %132 : vector<2x32xf32>
    %140 = arith.mulf %139, %137 : vector<2x32xf32>
    %141 = arith.mulf %132, %116 : vector<2x32xf32>
    %142 = arith.addf %140, %141 : vector<2x32xf32>
    %143 = arith.truncf %142 : vector<2x32xf32> to vector<2x32xbf16>
    %cst_25 = arith.constant dense<0.000000e+00> : vector<2x96xf32>
    %144 = tpu.matmul %143, %2, %cst_25 {dimension_numbers = #tpu.dot_dimension_numbers<[1], [0], [0], [1], [0, 0, 1, 1], [], []>} : vector<2x32xbf16>, vector<32x96xbf16>, vector<2x96xf32> -> vector<2x96xf32>
    %145 = vector.broadcast %4 : vector<1x96xf32> to vector<2x96xf32>
    %146 = arith.addf %144, %145 : vector<2x96xf32>
    %147 = vector.extract_strided_slice %10 {offsets = [0, 5, 0], sizes = [2, 1, 96], strides = [1, 1, 1]} : vector<2x8x96xf32> to vector<2x1x96xf32>
    %148 = vector.shape_cast %147 : vector<2x1x96xf32> to vector<2x96xf32>
    %149 = vector.extract_strided_slice %148 {offsets = [0, 0], sizes = [2, 64], strides = [1, 1]} : vector<2x96xf32> to vector<2x64xf32>
    %150 = vector.extract_strided_slice %146 {offsets = [0, 0], sizes = [2, 64], strides = [1, 1]} : vector<2x96xf32> to vector<2x64xf32>
    %151 = arith.addf %149, %150 : vector<2x64xf32>
    %152 = arith.negf %151 : vector<2x64xf32>
    %153 = math.exp %152 : vector<2x64xf32>
    %cst_26 = arith.constant 1.000000e+00 : f32
    %154 = vector.broadcast %cst_26 : f32 to vector<2x64xf32>
    %155 = arith.addf %154, %153 : vector<2x64xf32>
    %156 = arith.divf %154, %155 : vector<2x64xf32>
    %157 = vector.extract_strided_slice %156 {offsets = [0, 0], sizes = [2, 32], strides = [1, 1]} : vector<2x64xf32> to vector<2x32xf32>
    %158 = vector.extract_strided_slice %156 {offsets = [0, 32], sizes = [2, 32], strides = [1, 1]} : vector<2x64xf32> to vector<2x32xf32>
    %159 = vector.extract_strided_slice %148 {offsets = [0, 64], sizes = [2, 32], strides = [1, 1]} : vector<2x96xf32> to vector<2x32xf32>
    %160 = vector.extract_strided_slice %146 {offsets = [0, 64], sizes = [2, 32], strides = [1, 1]} : vector<2x96xf32> to vector<2x32xf32>
    %161 = arith.mulf %157, %160 : vector<2x32xf32>
    %162 = arith.addf %159, %161 : vector<2x32xf32>
    %163 = math.tanh %162 : vector<2x32xf32>
    %cst_27 = arith.constant 1.000000e+00 : f32
    %164 = vector.broadcast %cst_27 : f32 to vector<2x32xf32>
    %165 = arith.subf %164, %158 : vector<2x32xf32>
    %166 = arith.mulf %165, %163 : vector<2x32xf32>
    %167 = arith.mulf %158, %142 : vector<2x32xf32>
    %168 = arith.addf %166, %167 : vector<2x32xf32>
    %169 = arith.truncf %168 : vector<2x32xf32> to vector<2x32xbf16>
    %cst_28 = arith.constant dense<0.000000e+00> : vector<2x96xf32>
    %170 = tpu.matmul %169, %2, %cst_28 {dimension_numbers = #tpu.dot_dimension_numbers<[1], [0], [0], [1], [0, 0, 1, 1], [], []>} : vector<2x32xbf16>, vector<32x96xbf16>, vector<2x96xf32> -> vector<2x96xf32>
    %171 = vector.broadcast %4 : vector<1x96xf32> to vector<2x96xf32>
    %172 = arith.addf %170, %171 : vector<2x96xf32>
    %173 = vector.extract_strided_slice %10 {offsets = [0, 6, 0], sizes = [2, 1, 96], strides = [1, 1, 1]} : vector<2x8x96xf32> to vector<2x1x96xf32>
    %174 = vector.shape_cast %173 : vector<2x1x96xf32> to vector<2x96xf32>
    %175 = vector.extract_strided_slice %174 {offsets = [0, 0], sizes = [2, 64], strides = [1, 1]} : vector<2x96xf32> to vector<2x64xf32>
    %176 = vector.extract_strided_slice %172 {offsets = [0, 0], sizes = [2, 64], strides = [1, 1]} : vector<2x96xf32> to vector<2x64xf32>
    %177 = arith.addf %175, %176 : vector<2x64xf32>
    %178 = arith.negf %177 : vector<2x64xf32>
    %179 = math.exp %178 : vector<2x64xf32>
    %cst_29 = arith.constant 1.000000e+00 : f32
    %180 = vector.broadcast %cst_29 : f32 to vector<2x64xf32>
    %181 = arith.addf %180, %179 : vector<2x64xf32>
    %182 = arith.divf %180, %181 : vector<2x64xf32>
    %183 = vector.extract_strided_slice %182 {offsets = [0, 0], sizes = [2, 32], strides = [1, 1]} : vector<2x64xf32> to vector<2x32xf32>
    %184 = vector.extract_strided_slice %182 {offsets = [0, 32], sizes = [2, 32], strides = [1, 1]} : vector<2x64xf32> to vector<2x32xf32>
    %185 = vector.extract_strided_slice %174 {offsets = [0, 64], sizes = [2, 32], strides = [1, 1]} : vector<2x96xf32> to vector<2x32xf32>
    %186 = vector.extract_strided_slice %172 {offsets = [0, 64], sizes = [2, 32], strides = [1, 1]} : vector<2x96xf32> to vector<2x32xf32>
    %187 = arith.mulf %183, %186 : vector<2x32xf32>
    %188 = arith.addf %185, %187 : vector<2x32xf32>
    %189 = math.tanh %188 : vector<2x32xf32>
    %cst_30 = arith.constant 1.000000e+00 : f32
    %190 = vector.broadcast %cst_30 : f32 to vector<2x32xf32>
    %191 = arith.subf %190, %184 : vector<2x32xf32>
    %192 = arith.mulf %191, %189 : vector<2x32xf32>
    %193 = arith.mulf %184, %168 : vector<2x32xf32>
    %194 = arith.addf %192, %193 : vector<2x32xf32>
    %195 = arith.truncf %194 : vector<2x32xf32> to vector<2x32xbf16>
    %cst_31 = arith.constant dense<0.000000e+00> : vector<2x96xf32>
    %196 = tpu.matmul %195, %2, %cst_31 {dimension_numbers = #tpu.dot_dimension_numbers<[1], [0], [0], [1], [0, 0, 1, 1], [], []>} : vector<2x32xbf16>, vector<32x96xbf16>, vector<2x96xf32> -> vector<2x96xf32>
    %197 = vector.broadcast %4 : vector<1x96xf32> to vector<2x96xf32>
    %198 = arith.addf %196, %197 : vector<2x96xf32>
    %199 = vector.extract_strided_slice %10 {offsets = [0, 7, 0], sizes = [2, 1, 96], strides = [1, 1, 1]} : vector<2x8x96xf32> to vector<2x1x96xf32>
    %200 = vector.shape_cast %199 : vector<2x1x96xf32> to vector<2x96xf32>
    %201 = vector.extract_strided_slice %200 {offsets = [0, 0], sizes = [2, 64], strides = [1, 1]} : vector<2x96xf32> to vector<2x64xf32>
    %202 = vector.extract_strided_slice %198 {offsets = [0, 0], sizes = [2, 64], strides = [1, 1]} : vector<2x96xf32> to vector<2x64xf32>
    %203 = arith.addf %201, %202 : vector<2x64xf32>
    %204 = arith.negf %203 : vector<2x64xf32>
    %205 = math.exp %204 : vector<2x64xf32>
    %cst_32 = arith.constant 1.000000e+00 : f32
    %206 = vector.broadcast %cst_32 : f32 to vector<2x64xf32>
    %207 = arith.addf %206, %205 : vector<2x64xf32>
    %208 = arith.divf %206, %207 : vector<2x64xf32>
    %209 = vector.extract_strided_slice %208 {offsets = [0, 0], sizes = [2, 32], strides = [1, 1]} : vector<2x64xf32> to vector<2x32xf32>
    %210 = vector.extract_strided_slice %208 {offsets = [0, 32], sizes = [2, 32], strides = [1, 1]} : vector<2x64xf32> to vector<2x32xf32>
    %211 = vector.extract_strided_slice %200 {offsets = [0, 64], sizes = [2, 32], strides = [1, 1]} : vector<2x96xf32> to vector<2x32xf32>
    %212 = vector.extract_strided_slice %198 {offsets = [0, 64], sizes = [2, 32], strides = [1, 1]} : vector<2x96xf32> to vector<2x32xf32>
    %213 = arith.mulf %209, %212 : vector<2x32xf32>
    %214 = arith.addf %211, %213 : vector<2x32xf32>
    %215 = math.tanh %214 : vector<2x32xf32>
    %cst_33 = arith.constant 1.000000e+00 : f32
    %216 = vector.broadcast %cst_33 : f32 to vector<2x32xf32>
    %217 = arith.subf %216, %210 : vector<2x32xf32>
    %218 = arith.mulf %217, %215 : vector<2x32xf32>
    %219 = arith.mulf %210, %194 : vector<2x32xf32>
    %220 = arith.addf %218, %219 : vector<2x32xf32>
    %221 = vector.shape_cast %38 : vector<2x32xf32> to vector<2x1x32xf32>
    %222 = vector.shape_cast %64 : vector<2x32xf32> to vector<2x1x32xf32>
    %223 = vector.shape_cast %90 : vector<2x32xf32> to vector<2x1x32xf32>
    %224 = vector.shape_cast %116 : vector<2x32xf32> to vector<2x1x32xf32>
    %225 = vector.shape_cast %142 : vector<2x32xf32> to vector<2x1x32xf32>
    %226 = vector.shape_cast %168 : vector<2x32xf32> to vector<2x1x32xf32>
    %227 = vector.shape_cast %194 : vector<2x32xf32> to vector<2x1x32xf32>
    %228 = vector.shape_cast %220 : vector<2x32xf32> to vector<2x1x32xf32>
    %229 = tpu.concatenate %221, %222, %223, %224, %225, %226, %227, %228 in 1 : vector<2x1x32xf32>, vector<2x1x32xf32>, vector<2x1x32xf32>, vector<2x1x32xf32>, vector<2x1x32xf32>, vector<2x1x32xf32>, vector<2x1x32xf32>, vector<2x1x32xf32> -> vector<2x8x32xf32>
    %c0_34 = arith.constant 0 : index
    %c0_35 = arith.constant 0 : index
    %c0_36 = arith.constant 0 : index
    %230 = vector.load %arg4[%c0_34, %c0_35, %c0_36] : memref<2x8x16xf32, #tpu.memory_space<vmem>>, vector<2x8x16xf32>
    %231 = arith.truncf %229 : vector<2x8x32xf32> to vector<2x8x32xbf16>
    %232 = vector.extract_strided_slice %230 {offsets = [0, 0, 0], sizes = [2, 8, 8], strides = [1, 1, 1]} : vector<2x8x16xf32> to vector<2x8x8xf32>
    %cst_37 = arith.constant 0.176776692 : f32
    %233 = vector.broadcast %cst_37 : f32 to vector<2x8x32xf32>
    %234 = arith.mulf %229, %233 : vector<2x8x32xf32>
    %235 = arith.truncf %234 : vector<2x8x32xf32> to vector<2x8x32xbf16>
    "tpu.trace_start"() <{level = 10 : i32, message = "bth,bsh->bts"}> : () -> ()
    %cst_38 = arith.constant dense<0.000000e+00> : vector<2x8x8xf32>
    %236 = tpu.matmul %235, %231, %cst_38 {dimension_numbers = #tpu.dot_dimension_numbers<[2], [2], [1], [1], [0, 0, 0, 1, 1, 1], [0], [0]>} : vector<2x8x32xbf16>, vector<2x8x32xbf16>, vector<2x8x8xf32> -> vector<2x8x8xf32>
    "tpu.trace_stop"() : () -> ()
    %237 = arith.addf %236, %232 : vector<2x8x8xf32>
    %cst_39 = arith.constant dense<0xFF800000> : vector<2x8xf32>
    %238 = vector.multi_reduction <maximumf>, %237, %cst_39 [2] : vector<2x8x8xf32> to vector<2x8xf32>
    %239 = vector.shape_cast %238 : vector<2x8xf32> to vector<2x8x1xf32>
    %240 = vector.broadcast %239 : vector<2x8x1xf32> to vector<2x8x8xf32>
    %241 = arith.subf %237, %240 : vector<2x8x8xf32>
    %242 = math.exp %241 : vector<2x8x8xf32>
    %cst_40 = arith.constant dense<0.000000e+00> : vector<2x8xf32>
    %243 = vector.multi_reduction <add>, %242, %cst_40 [2] : vector<2x8x8xf32> to vector<2x8xf32>
    %244 = vector.shape_cast %243 : vector<2x8xf32> to vector<2x8x1xf32>
    %245 = tpu.reciprocal %244 {approx = true} : vector<2x8x1xf32> -> vector<2x8x1xf32>
    %246 = vector.broadcast %245 : vector<2x8x1xf32> to vector<2x8x8xf32>
    %247 = arith.mulf %242, %246 : vector<2x8x8xf32>
    %248 = arith.truncf %247 : vector<2x8x8xf32> to vector<2x8x8xbf16>
    "tpu.trace_start"() <{level = 10 : i32, message = "bts,bsh->bth"}> : () -> ()
    %cst_41 = arith.constant dense<0.000000e+00> : vector<2x8x32xf32>
    %249 = tpu.matmul %248, %231, %cst_41 {dimension_numbers = #tpu.dot_dimension_numbers<[2], [1], [1], [2], [0, 0, 0, 1, 1, 2], [0], [0]>} : vector<2x8x8xbf16>, vector<2x8x32xbf16>, vector<2x8x32xf32> -> vector<2x8x32xf32>
    "tpu.trace_stop"() : () -> ()
    %c0_42 = arith.constant 0 : index
    %c0_43 = arith.constant 0 : index
    %c0_44 = arith.constant 0 : index
    %250 = vector.load %arg3[%c0_42, %c0_43, %c0_44] : memref<2x8x32xbf16, #tpu.memory_space<vmem>>, vector<2x8x32xbf16>
    %251 = vector.extract_strided_slice %230 {offsets = [0, 0, 8], sizes = [2, 8, 8], strides = [1, 1, 1]} : vector<2x8x16xf32> to vector<2x8x8xf32>
    %cst_45 = arith.constant 0.176776692 : f32
    %252 = vector.broadcast %cst_45 : f32 to vector<2x8x32xf32>
    %253 = arith.mulf %249, %252 : vector<2x8x32xf32>
    %254 = arith.truncf %253 : vector<2x8x32xf32> to vector<2x8x32xbf16>
    "tpu.trace_start"() <{level = 10 : i32, message = "bth,bsh->bts"}> : () -> ()
    %cst_46 = arith.constant dense<0.000000e+00> : vector<2x8x8xf32>
    %255 = tpu.matmul %254, %250, %cst_46 {dimension_numbers = #tpu.dot_dimension_numbers<[2], [2], [1], [1], [0, 0, 0, 1, 1, 1], [0], [0]>} : vector<2x8x32xbf16>, vector<2x8x32xbf16>, vector<2x8x8xf32> -> vector<2x8x8xf32>
    "tpu.trace_stop"() : () -> ()
    %256 = arith.addf %255, %251 : vector<2x8x8xf32>
    %cst_47 = arith.constant dense<0xFF800000> : vector<2x8xf32>
    %257 = vector.multi_reduction <maximumf>, %256, %cst_47 [2] : vector<2x8x8xf32> to vector<2x8xf32>
    %258 = vector.shape_cast %257 : vector<2x8xf32> to vector<2x8x1xf32>
    %259 = vector.broadcast %258 : vector<2x8x1xf32> to vector<2x8x8xf32>
    %260 = arith.subf %256, %259 : vector<2x8x8xf32>
    %261 = math.exp %260 : vector<2x8x8xf32>
    %cst_48 = arith.constant dense<0.000000e+00> : vector<2x8xf32>
    %262 = vector.multi_reduction <add>, %261, %cst_48 [2] : vector<2x8x8xf32> to vector<2x8xf32>
    %263 = vector.shape_cast %262 : vector<2x8xf32> to vector<2x8x1xf32>
    %264 = tpu.reciprocal %263 {approx = true} : vector<2x8x1xf32> -> vector<2x8x1xf32>
    %265 = vector.broadcast %264 : vector<2x8x1xf32> to vector<2x8x8xf32>
    %266 = arith.mulf %261, %265 : vector<2x8x8xf32>
    %267 = arith.truncf %266 : vector<2x8x8xf32> to vector<2x8x8xbf16>
    "tpu.trace_start"() <{level = 10 : i32, message = "bts,bsh->bth"}> : () -> ()
    %cst_49 = arith.constant dense<0.000000e+00> : vector<2x8x32xf32>
    %268 = tpu.matmul %267, %250, %cst_49 {dimension_numbers = #tpu.dot_dimension_numbers<[2], [1], [1], [2], [0, 0, 0, 1, 1, 2], [0], [0]>} : vector<2x8x8xbf16>, vector<2x8x32xbf16>, vector<2x8x32xf32> -> vector<2x8x32xf32>
    "tpu.trace_stop"() : () -> ()
    %c0_50 = arith.constant 0 : index
    %c0_51 = arith.constant 0 : index
    %c0_52 = arith.constant 0 : index
    %269 = vector.load %arg7[%c0_50, %c0_51, %c0_52] : memref<2x8x32xf32, #tpu.memory_space<vmem>>, vector<2x8x32xf32>
    tpu.vector_store %arg7[%c0_50, %c0_51, %c0_52], %268 {strides = array<i32>} : memref<2x8x32xf32, #tpu.memory_space<vmem>>, vector<2x8x32xf32>,
    return
  }
  func.func @transform_0(%arg0: i32) -> (i32, i32, i32) {
    %c0_i32 = arith.constant 0 : i32
    %c0_i32_0 = arith.constant 0 : i32
    %c0_i32_1 = arith.constant 0 : i32
    return %arg0, %c0_i32, %c0_i32_0 : i32, i32, i32
  }
  func.func @transform_1(%arg0: i32) -> (i32, i32, i32) {
    %c0_i32 = arith.constant 0 : i32
    %c0_i32_0 = arith.constant 0 : i32
    %c0_i32_1 = arith.constant 0 : i32
    return %arg0, %c0_i32, %c0_i32_0 : i32, i32, i32
  }
  func.func @transform_2(%arg0: i32) -> (i32, i32, i32) {
    %c0_i32 = arith.constant 0 : i32
    %c0_i32_0 = arith.constant 0 : i32
    %c0_i32_1 = arith.constant 0 : i32
    return %arg0, %c0_i32, %c0_i32_0 : i32, i32, i32
  }
  func.func @transform_3(%arg0: i32) -> (i32, i32, i32) {
    %c0_i32 = arith.constant 0 : i32
    %c0_i32_0 = arith.constant 0 : i32
    %c0_i32_1 = arith.constant 0 : i32
    return %arg0, %c0_i32, %c0_i32_0 : i32, i32, i32
  }
  func.func @transform_4(%arg0: i32) -> (i32, i32) {
    %c0_i32 = arith.constant 0 : i32
    %c0_i32_0 = arith.constant 0 : i32
    %c0_i32_1 = arith.constant 0 : i32
    return %c0_i32, %c0_i32_0 : i32, i32
  }
  func.func @transform_5(%arg0: i32) -> (i32, i32) {
    %c0_i32 = arith.constant 0 : i32
    %c0_i32_0 = arith.constant 0 : i32
    %c0_i32_1 = arith.constant 0 : i32
    return %c0_i32, %c0_i32_0 : i32, i32
  }
  func.func @transform_6(%arg0: i32) -> (i32, i32, i32) {
    %c0_i32 = arith.constant 0 : i32
    %c0_i32_0 = arith.constant 0 : i32
    %c0_i32_1 = arith.constant 0 : i32
    return %arg0, %c0_i32, %c0_i32_0 : i32, i32, i32
  }
}

</mosaic_0001>

<llo_original>
// kernel: attention_decoder_layer.1
$region0: #{attention_decoder_layer.1}
  #allocation0 [shape = 'u32[]', space=smem, size = 0x4, offset = 0x4, fixed_abs, tag = 'smem constant byte address 0x4 - core index']
  #allocation1 [shape = 'u32[144,128]{1,0:T(1,128)}', space=vmem, size = 0x12000, scoped, tag = 'internal scratch']
  %s0 = inlined_call_operand.vmem [shape: bf16[2,8,4], index: 0, kind: input, shape index: {}]
  %s1 = inlined_call_operand.vmem [shape: f32[2,1,32], index: 1, kind: input, shape index: {}]
  %s2 = inlined_call_operand.vmem [shape: bf16[2,8,32], index: 2, kind: input, shape index: {}]
  %s3 = inlined_call_operand.vmem [shape: f32[2,8,16], index: 3, kind: input, shape index: {}]
  %s4 = inlined_call_operand.vmem [shape: bf16[36,96], index: 4, kind: input, shape index: {}]
  %s5 = inlined_call_operand.vmem [shape: f32[2,96], index: 5, kind: input, shape index: {}]
  %s6 = inlined_call_operand.hbm [shape: f32[2,8,32], index: 6, kind: output, shape index: {}]
  %s7 = sld [smem:[#allocation0]]
  $region34: #{attention_decoder_layer.1} parent=0
    _
  %s9 = ssub.s32 1, %s7
  %s10 = scalar_select 0, %s9, %s7
  $region1: #{attention_decoder_layer.1} parent=0
    #allocation2 [shape = 'u8[8192]{0}', space=vmem, size = 0x2000, scoped, tag = 'output window, operand 0, single buffered']
    #allocation3 [shape = 's32[1]{0}', space=sflag, size = 0x4, scoped, tag = 'scoped memory for attention_decoder_layer.1']
    %11 = vsyncpa [#allocation3], 0
    // Predicated region
    $region2: #{attention_decoder_layer.1} parent=1 // pred_check
      _
    $region3: #{attention_decoder_layer.1} parent=1 // pred_check_branch
      %13 = sbr.rel (0) target = $region5
    $region4: #{attention_decoder_layer.1} parent=1 // pred_region
      _
    $region5: #{attention_decoder_layer.1} parent=1 // pred_fallthru
      _
    // Predicated region
    $region6: #{attention_decoder_layer.1} parent=1 // pred_check
      _
    $region7: #{attention_decoder_layer.1} parent=1 // pred_check_branch
      %15 = sbr.rel (0) target = $region9
    $region8: #{attention_decoder_layer.1} parent=1 // pred_region
      _
    $region9: #{attention_decoder_layer.1} parent=1 // pred_fallthru
      _
    // Predicated region
    $region10: #{attention_decoder_layer.1} parent=1 // pred_check
      _
    $region11: #{attention_decoder_layer.1} parent=1 // pred_check_branch
      %17 = sbr.rel (0) target = $region13
    $region12: #{attention_decoder_layer.1} parent=1 // pred_region
      _
    $region13: #{attention_decoder_layer.1} parent=1 // pred_fallthru
      _
    // Predicated region
    $region14: #{attention_decoder_layer.1} parent=1 // pred_check
      _
    $region15: #{attention_decoder_layer.1} parent=1 // pred_check_branch
      %19 = sbr.rel (0) target = $region17
    $region16: #{attention_decoder_layer.1} parent=1 // pred_region
      _
    $region17: #{attention_decoder_layer.1} parent=1 // pred_fallthru
      _
    // Predicated region
    $region18: #{attention_decoder_layer.1} parent=1 // pred_check
      _
    $region19: #{attention_decoder_layer.1} parent=1 // pred_check_branch
      %21 = sbr.rel (0) target = $region21
    $region20: #{attention_decoder_layer.1} parent=1 // pred_region
      _
    $region21: #{attention_decoder_layer.1} parent=1 // pred_fallthru
      _
    // Predicated region
    $region22: #{attention_decoder_layer.1} parent=1 // pred_check
      _
    $region23: #{attention_decoder_layer.1} parent=1 // pred_check_branch
      %23 = sbr.rel (0) target = $region25
    $region24: #{attention_decoder_layer.1} parent=1 // pred_region
      _
    $region25: #{attention_decoder_layer.1} parent=1 // pred_fallthru
      _
    %v25 = vld [vmem:[%s4] sm:$0xf]
    %v26 = vld [vmem:[%s4 + $0x4] sm:$0xf]
    %v27 = vld [vmem:[%s4 + $0x8] sm:$0xf]
    %v28 = vld [vmem:[%s4 + $0xc] sm:$0xf]
    %v29 = vld [vmem:[%s4 + $0x10] sm:$0x3]
    %v30 = vld [vmem:[%s5] sm:$0x1]
    %v31 = vld [vmem:[%s5 + $0x1] sm:$0x1]
    %v32 = vld [vmem:[%s0] sm:$0xf]
    %v33 = vld [vmem:[%s0 + $0x4] sm:$0xf]
    %v34 = vlaneseq
    %v35 = vshrl.u32 %v34, 7
    %v36 = vsub.s32 0, %v35
    %v37 = vrot.slane %v30, %v36
    %v40 = vunpack.c.l.b16 %v32
    %v41 = vunpack.c.l.b16 %v33
    %v42 = vpack.c.b16 %v41, %v40
    %vm43 = vcmask 31744
    %v45 = vsel %vm43, %v42, 0
    %vm47 = vcmask 1041408
    %v49 = vsel %vm47, %v25, 0
    %51 = vmatprep.subr.bf16.mxu0 0
    %52 = vmatpush1.bf16.msra.mxu0 %v49
    %53 = vmatprep.subr.bf16.mxu0 0
    %54 = vmatpush1.bf16.msra.mxu0 0
    %55 = vmatprep.subr.bf16.mxu0 0
    %56 = vmatpush1.bf16.msra.mxu0 0
    %57 = vmatprep.subr.bf16.mxu0 0
    %58 = vmatpush1.bf16.msra.mxu0 0
    %59 = vmatprep.subr.bf16.mxu0 0
    %60 = vmatpush1.bf16.msra.mxu0 0
    %61 = vmatprep.subr.bf16.mxu0 0
    %62 = vmatpush1.bf16.msra.mxu0 0
    %63 = vmatprep.subr.bf16.mxu0 0
    %64 = vmatpush1.bf16.msra.mxu0 0
    %65 = vmatprep.subr.bf16.mxu0 0
    %66 = vmatpush1.bf16.msra.mxu0 0
    %67 = vmatprep.subr.bf16.mxu0 0
    %68 = vmatpush1.bf16.msra.mxu0 0
    %69 = vmatprep.subr.bf16.mxu0 0
    %70 = vmatpush1.bf16.msra.mxu0 0
    %71 = vmatprep.subr.bf16.mxu0 0
    %72 = vmatpush1.bf16.msra.mxu0 0
    %73 = vmatprep.subr.bf16.mxu0 0
    %74 = vmatpush1.bf16.msra.mxu0 0
    %75 = vmatprep.subr.bf16.mxu0 0
    %76 = vmatpush1.bf16.msra.mxu0 0
    %77 = vmatprep.subr.bf16.mxu0 0
    %78 = vmatpush1.bf16.msra.mxu0 0
    %79 = vmatprep.subr.bf16.mxu0 0
    %80 = vmatpush1.bf16.msra.mxu0 0
    %81 = vmatprep.subr.bf16.mxu0 0
    %82 = vmatpush1.bf16.msra.mxu0 0
    %83 = vmatprep.mubr.bf16.mxu0 0
    %84 = vmatmul.mubr.bf16.gmra.mrb[0].mxu0 %v45
    %v85 = vpop.f32.mrb[0].mxu0
    %v86 = vadd.f32 %v37, %v85
    %v87 = vpop.f32.mrb[0].mxu0
    %v88 = vpop.f32.mrb[0].mxu0
    %v89 = vadd.f32 %v37, %v88
    %v90 = vpop.f32.mrb[0].mxu0
    %91 = vdwg.mxu0
    %v92 = vld [vmem:[%s1] sm:$0x1]
    %v93 = vld [vmem:[%s1 + $0x1] sm:$0x1]
    %v94 = vpack.c.bf16 %v92, %v92
    %v95 = vpack.c.bf16 %v93, %v93
    %v96 = vlaneseq
    %v97 = vshrl.u32 %v96, 7
    %v98 = vsub.s32 0, %v97
    %v99 = vrot.slane %v31, %v98
    %v102 = vunpack.c.l.b16 %v94
    %v103 = vunpack.c.l.b16 %v95
    %v104 = vrot.slane %v103, 7
    %vm105 = vcmask 1041409
    %v106 = vsel %vm105, %v104, %v102
    %v107 = vpack.c.b16 %v106, %v106
    %v113 = vunpack.c.l.b16 %v25
    %v114 = vunpack.c.l.b16 %v26
    %v115 = vunpack.c.l.b16 %v27
    %v116 = vunpack.c.l.b16 %v28
    %v117 = vunpack.c.l.b16 %v29
    %v118 = vpack.c.b16 %v114, %v113
    %v119 = vpack.c.b16 %v116, %v115
    %v120 = vpack.c.b16 %v117, %v117
    %vm121 = vcmask 1045504
    %v122 = vrot.slane %v118, 2
    %v123 = vrot.slane %v119, 2
    %v124 = vsel %vm121, %v122, %v123
    %v125 = vrot.slane %v120, 2
    %v126 = vsel %vm121, %v123, %v125
    %vm129 = vcmask 261120
    %v131 = vsel %vm129, %v107, 0
    %133 = vmatprep.subr.bf16.mxu0 0
    %134 = vmatpush1.bf16.msra.mxu0 %v124
    %135 = vmatprep.subr.bf16.mxu0 0
    %136 = vmatpush1.bf16.msra.mxu0 %v126
    %137 = vmatprep.subr.bf16.mxu0 0
    %138 = vmatpush1.bf16.msra.mxu0 0
    %139 = vmatprep.subr.bf16.mxu0 0
    %140 = vmatpush1.bf16.msra.mxu0 0
    %141 = vmatprep.subr.bf16.mxu0 0
    %142 = vmatpush1.bf16.msra.mxu0 0
    %143 = vmatprep.subr.bf16.mxu0 0
    %144 = vmatpush1.bf16.msra.mxu0 0
    %145 = vmatprep.subr.bf16.mxu0 0
    %146 = vmatpush1.bf16.msra.mxu0 0
    %147 = vmatprep.subr.bf16.mxu0 0
    %148 = vmatpush1.bf16.msra.mxu0 0
    %149 = vmatprep.subr.bf16.mxu0 0
    %150 = vmatpush1.bf16.msra.mxu0 0
    %151 = vmatprep.subr.bf16.mxu0 0
    %152 = vmatpush1.bf16.msra.mxu0 0
    %153 = vmatprep.subr.bf16.mxu0 0
    %154 = vmatpush1.bf16.msra.mxu0 0
    %155 = vmatprep.subr.bf16.mxu0 0
    %156 = vmatpush1.bf16.msra.mxu0 0
    %157 = vmatprep.subr.bf16.mxu0 0
    %158 = vmatpush1.bf16.msra.mxu0 0
    %159 = vmatprep.subr.bf16.mxu0 0
    %160 = vmatpush1.bf16.msra.mxu0 0
    %161 = vmatprep.subr.bf16.mxu0 0
    %162 = vmatpush1.bf16.msra.mxu0 0
    %163 = vmatprep.subr.bf16.mxu0 0
    %164 = vmatpush1.bf16.msra.mxu0 0
    %165 = vmatprep.mubr.bf16.mxu0 0
    %166 = vmatmul.mubr.bf16.gmra.mrb[0].mxu0 %v131
    %v167 = vpop.f32.mrb[0].mxu0
    %v168 = vadd.f32 %v99, %v167
    %v169 = vpop.f32.mrb[0].mxu0
    %v170 = vpop.f32.mrb[0].mxu0
    %v171 = vpop.f32.mrb[0].mxu0
    %172 = vdwg.mxu0
    %v174 = vrot.slane %v168, 1
    %v177 = vadd.f32 %v86, %v168
    %v178 = vadd.f32 %v89, %v174
    %v179 = vxor.u32 %v177, 2147483648
    %v180 = vxor.u32 %v178, 2147483648
    %v181 = vmul.f32 %v179, 1.442695
    %v182 = vpow.pop %v181
    %v183 = vmul.f32 %v180, 1.442695
    %v184 = vpow.pop %v183
    %v185 = vadd.f32 %v182, 1.0
    %v186 = vadd.f32 %v184, 1.0
    %v187 = vrcp.pop %v185
    %v188 = vmul.f32 1.0, %v187
    %v189 = vrcp.pop %v186
    %v190 = vmul.f32 1.0, %v189
    %191 = vrot.lane.b32.xlu0 %v168, 64
    %v192 = vpop.permute.xlu0 %191
    %193 = vrot.lane.b32.xlu0 %v174, 64
    %v194 = vpop.permute.xlu0 %193
    %v197 = vmul.f32 %v188, %v192
    %v198 = vmul.f32 %v190, %v194
    %201 = vrot.lane.b32.xlu0 %v197, 64
    %v202 = vpop.permute.xlu0 %201
    %203 = vrot.lane.b32.xlu0 %v198, 64
    %v204 = vpop.permute.xlu0 %203
    %v207 = vadd.f32 %v86, %v202
    %v208 = vadd.f32 %v89, %v204
    %v209 = vtanh.pop %v207
    %v210 = vtanh.pop %v208
    %v211 = vsub.f32 1.0, %v188
    %v212 = vsub.f32 1.0, %v190
    %215 = vrot.lane.b32.xlu0 %v209, 96
    %v216 = vpop.permute.xlu0 %215
    %217 = vrot.lane.b32.xlu0 %v210, 96
    %v218 = vpop.permute.xlu0 %217
    %v221 = vmul.f32 %v211, %v216
    %v222 = vmul.f32 %v212, %v218
    %v225 = vlaneseq
    %v226 = vshrl.u32 %v225, 7
    %v227 = vsub.s32 0, %v226
    %v228 = vrot.slane %v92, %v227
    %v229 = vlaneseq
    %v230 = vshrl.u32 %v229, 7
    %v231 = vsub.s32 0, %v230
    %v232 = vrot.slane %v93, %v231
    %233 = vrot.lane.b32.xlu0 %v228, 32
    %v234 = vpop.permute.xlu0 %233
    %235 = vrot.lane.b32.xlu0 %v232, 32
    %v236 = vpop.permute.xlu0 %235
    %v239 = vmul.f32 %v188, %v234
    %v240 = vmul.f32 %v190, %v236
    %v241 = vadd.f32 %v221, %v239
    %v242 = vadd.f32 %v222, %v240
    %v243 = vpack.c.bf16 %v241, %v241
    %v244 = vpack.c.bf16 %v242, %v242
    %v247 = vunpack.c.l.b16 %v243
    %v248 = vunpack.c.l.b16 %v244
    %v249 = vrot.slane %v248, 7
    %v250 = vsel %vm105, %v249, %v247
    %v251 = vpack.c.b16 %v250, %v250
    %252 = vrot.lane.b32.xlu0 %v251, 96
    %v253 = vpop.permute.xlu0 %252
    %v255 = vsel %vm129, %v253, 0
    %257 = vmatprep.subr.bf16.mxu0 0
    %258 = vmatpush1.bf16.msra.mxu0 %v124
    %259 = vmatprep.subr.bf16.mxu0 0
    %260 = vmatpush1.bf16.msra.mxu0 %v126
    %261 = vmatprep.subr.bf16.mxu0 0
    %262 = vmatpush1.bf16.msra.mxu0 0
    %263 = vmatprep.subr.bf16.mxu0 0
    %264 = vmatpush1.bf16.msra.mxu0 0
    %265 = vmatprep.subr.bf16.mxu0 0
    %266 = vmatpush1.bf16.msra.mxu0 0
    %267 = vmatprep.subr.bf16.mxu0 0
    %268 = vmatpush1.bf16.msra.mxu0 0
    %269 = vmatprep.subr.bf16.mxu0 0
    %270 = vmatpush1.bf16.msra.mxu0 0
    %271 = vmatprep.subr.bf16.mxu0 0
    %272 = vmatpush1.bf16.msra.mxu0 0
    %273 = vmatprep.subr.bf16.mxu0 0
    %274 = vmatpush1.bf16.msra.mxu0 0
    %275 = vmatprep.subr.bf16.mxu0 0
    %276 = vmatpush1.bf16.msra.mxu0 0
    %277 = vmatprep.subr.bf16.mxu0 0
    %278 = vmatpush1.bf16.msra.mxu0 0
    %279 = vmatprep.subr.bf16.mxu0 0
    %280 = vmatpush1.bf16.msra.mxu0 0
    %281 = vmatprep.subr.bf16.mxu0 0
    %282 = vmatpush1.bf16.msra.mxu0 0
    %283 = vmatprep.subr.bf16.mxu0 0
    %284 = vmatpush1.bf16.msra.mxu0 0
    %285 = vmatprep.subr.bf16.mxu0 0
    %286 = vmatpush1.bf16.msra.mxu0 0
    %287 = vmatprep.subr.bf16.mxu0 0
    %288 = vmatpush1.bf16.msra.mxu0 0
    %289 = vmatprep.mubr.bf16.mxu0 0
    %290 = vmatmul.mubr.bf16.gmra.mrb[0].mxu0 %v255
    %v291 = vpop.f32.mrb[0].mxu0
    %v292 = vadd.f32 %v99, %v291
    %v293 = vpop.f32.mrb[0].mxu0
    %v294 = vpop.f32.mrb[0].mxu0
    %v295 = vpop.f32.mrb[0].mxu0
    %296 = vdwg.mxu0
    %v298 = vrot.slane %v292, 7
    %v301 = vadd.f32 %v86, %v298
    %v302 = vadd.f32 %v89, %v292
    %v303 = vxor.u32 %v301, 2147483648
    %v304 = vxor.u32 %v302, 2147483648
    %v305 = vmul.f32 %v303, 1.442695
    %v306 = vpow.pop %v305
    %v307 = vmul.f32 %v304, 1.442695
    %v308 = vpow.pop %v307
    %v309 = vadd.f32 %v306, 1.0
    %v310 = vadd.f32 %v308, 1.0
    %v311 = vrcp.pop %v309
    %v312 = vmul.f32 1.0, %v311
    %v313 = vrcp.pop %v310
    %v314 = vmul.f32 1.0, %v313
    %315 = vrot.lane.b32.xlu0 %v298, 64
    %v316 = vpop.permute.xlu0 %315
    %317 = vrot.lane.b32.xlu0 %v292, 64
    %v318 = vpop.permute.xlu0 %317
    %v321 = vmul.f32 %v312, %v316
    %v322 = vmul.f32 %v314, %v318
    %325 = vrot.lane.b32.xlu0 %v321, 64
    %v326 = vpop.permute.xlu0 %325
    %327 = vrot.lane.b32.xlu0 %v322, 64
    %v328 = vpop.permute.xlu0 %327
    %v331 = vadd.f32 %v86, %v326
    %v332 = vadd.f32 %v89, %v328
    %v333 = vtanh.pop %v331
    %v334 = vtanh.pop %v332
    %v335 = vsub.f32 1.0, %v312
    %v336 = vsub.f32 1.0, %v314
    %339 = vrot.lane.b32.xlu0 %v333, 96
    %v340 = vpop.permute.xlu0 %339
    %341 = vrot.lane.b32.xlu0 %v334, 96
    %v342 = vpop.permute.xlu0 %341
    %v345 = vmul.f32 %v335, %v340
    %v346 = vmul.f32 %v336, %v342
    %v349 = vrot.slane %v241, 7
    %v350 = vrot.slane %v242, 7
    %v353 = vmul.f32 %v312, %v349
    %v354 = vmul.f32 %v314, %v350
    %v355 = vadd.f32 %v345, %v353
    %v356 = vadd.f32 %v346, %v354
    %v357 = vpack.c.bf16 %v355, %v355
    %v358 = vpack.c.bf16 %v356, %v356
    %v361 = vunpack.c.l.b16 %v357
    %v362 = vunpack.c.l.b16 %v358
    %v363 = vrot.slane %v361, 1
    %v364 = vsel %vm105, %v362, %v363
    %v365 = vpack.c.b16 %v364, %v364
    %366 = vrot.lane.b32.xlu0 %v365, 96
    %v367 = vpop.permute.xlu0 %366
    %v369 = vsel %vm129, %v367, 0
    %371 = vmatprep.subr.bf16.mxu0 0
    %372 = vmatpush1.bf16.msra.mxu0 %v124
    %373 = vmatprep.subr.bf16.mxu0 0
    %374 = vmatpush1.bf16.msra.mxu0 %v126
    %375 = vmatprep.subr.bf16.mxu0 0
    %376 = vmatpush1.bf16.msra.mxu0 0
    %377 = vmatprep.subr.bf16.mxu0 0
    %378 = vmatpush1.bf16.msra.mxu0 0
    %379 = vmatprep.subr.bf16.mxu0 0
    %380 = vmatpush1.bf16.msra.mxu0 0
    %381 = vmatprep.subr.bf16.mxu0 0
    %382 = vmatpush1.bf16.msra.mxu0 0
    %383 = vmatprep.subr.bf16.mxu0 0
    %384 = vmatpush1.bf16.msra.mxu0 0
    %385 = vmatprep.subr.bf16.mxu0 0
    %386 = vmatpush1.bf16.msra.mxu0 0
    %387 = vmatprep.subr.bf16.mxu0 0
    %388 = vmatpush1.bf16.msra.mxu0 0
    %389 = vmatprep.subr.bf16.mxu0 0
    %390 = vmatpush1.bf16.msra.mxu0 0
    %391 = vmatprep.subr.bf16.mxu0 0
    %392 = vmatpush1.bf16.msra.mxu0 0
    %393 = vmatprep.subr.bf16.mxu0 0
    %394 = vmatpush1.bf16.msra.mxu0 0
    %395 = vmatprep.subr.bf16.mxu0 0
    %396 = vmatpush1.bf16.msra.mxu0 0
    %397 = vmatprep.subr.bf16.mxu0 0
    %398 = vmatpush1.bf16.msra.mxu0 0
    %399 = vmatprep.subr.bf16.mxu0 0
    %400 = vmatpush1.bf16.msra.mxu0 0
    %401 = vmatprep.subr.bf16.mxu0 0
    %402 = vmatpush1.bf16.msra.mxu0 0
    %403 = vmatprep.mubr.bf16.mxu0 0
    %404 = vmatmul.mubr.bf16.gmra.mrb[0].mxu0 %v369
    %v405 = vpop.f32.mrb[0].mxu0
    %v406 = vadd.f32 %v99, %v405
    %v407 = vpop.f32.mrb[0].mxu0
    %v408 = vpop.f32.mrb[0].mxu0
    %v409 = vpop.f32.mrb[0].mxu0
    %410 = vdwg.mxu0
    %v412 = vrot.slane %v406, 6
    %v413 = vrot.slane %v406, 7
    %v416 = vadd.f32 %v86, %v412
    %v417 = vadd.f32 %v89, %v413
    %v418 = vxor.u32 %v416, 2147483648
    %v419 = vxor.u32 %v417, 2147483648
    %v420 = vmul.f32 %v418, 1.442695
    %v421 = vpow.pop %v420
    %v422 = vmul.f32 %v419, 1.442695
    %v423 = vpow.pop %v422
    %v424 = vadd.f32 %v421, 1.0
    %v425 = vadd.f32 %v423, 1.0
    %v426 = vrcp.pop %v424
    %v427 = vmul.f32 1.0, %v426
    %v428 = vrcp.pop %v425
    %v429 = vmul.f32 1.0, %v428
    %430 = vrot.lane.b32.xlu0 %v412, 64
    %v431 = vpop.permute.xlu0 %430
    %432 = vrot.lane.b32.xlu0 %v413, 64
    %v433 = vpop.permute.xlu0 %432
    %v436 = vmul.f32 %v427, %v431
    %v437 = vmul.f32 %v429, %v433
    %440 = vrot.lane.b32.xlu0 %v436, 64
    %v441 = vpop.permute.xlu0 %440
    %442 = vrot.lane.b32.xlu0 %v437, 64
    %v443 = vpop.permute.xlu0 %442
    %v446 = vadd.f32 %v86, %v441
    %v447 = vadd.f32 %v89, %v443
    %v448 = vtanh.pop %v446
    %v449 = vtanh.pop %v447
    %v450 = vsub.f32 1.0, %v427
    %v451 = vsub.f32 1.0, %v429
    %454 = vrot.lane.b32.xlu0 %v448, 96
    %v455 = vpop.permute.xlu0 %454
    %456 = vrot.lane.b32.xlu0 %v449, 96
    %v457 = vpop.permute.xlu0 %456
    %v460 = vmul.f32 %v450, %v455
    %v461 = vmul.f32 %v451, %v457
    %v464 = vrot.slane %v355, 7
    %v465 = vrot.slane %v356, 7
    %v468 = vmul.f32 %v427, %v464
    %v469 = vmul.f32 %v429, %v465
    %v470 = vadd.f32 %v460, %v468
    %v471 = vadd.f32 %v461, %v469
    %v472 = vpack.c.bf16 %v470, %v470
    %v473 = vpack.c.bf16 %v471, %v471
    %v476 = vunpack.c.l.b16 %v472
    %v477 = vunpack.c.l.b16 %v473
    %v478 = vrot.slane %v476, 2
    %v479 = vrot.slane %v477, 1
    %v480 = vsel %vm105, %v479, %v478
    %v481 = vpack.c.b16 %v480, %v480
    %482 = vrot.lane.b32.xlu0 %v481, 96
    %v483 = vpop.permute.xlu0 %482
    %v485 = vsel %vm129, %v483, 0
    %487 = vmatprep.subr.bf16.mxu0 0
    %488 = vmatpush1.bf16.msra.mxu0 %v124
    %489 = vmatprep.subr.bf16.mxu0 0
    %490 = vmatpush1.bf16.msra.mxu0 %v126
    %491 = vmatprep.subr.bf16.mxu0 0
    %492 = vmatpush1.bf16.msra.mxu0 0
    %493 = vmatprep.subr.bf16.mxu0 0
    %494 = vmatpush1.bf16.msra.mxu0 0
    %495 = vmatprep.subr.bf16.mxu0 0
    %496 = vmatpush1.bf16.msra.mxu0 0
    %497 = vmatprep.subr.bf16.mxu0 0
    %498 = vmatpush1.bf16.msra.mxu0 0
    %499 = vmatprep.subr.bf16.mxu0 0
    %500 = vmatpush1.bf16.msra.mxu0 0
    %501 = vmatprep.subr.bf16.mxu0 0
    %502 = vmatpush1.bf16.msra.mxu0 0
    %503 = vmatprep.subr.bf16.mxu0 0
    %504 = vmatpush1.bf16.msra.mxu0 0
    %505 = vmatprep.subr.bf16.mxu0 0
    %506 = vmatpush1.bf16.msra.mxu0 0
    %507 = vmatprep.subr.bf16.mxu0 0
    %508 = vmatpush1.bf16.msra.mxu0 0
    %509 = vmatprep.subr.bf16.mxu0 0
    %510 = vmatpush1.bf16.msra.mxu0 0
    %511 = vmatprep.subr.bf16.mxu0 0
    %512 = vmatpush1.bf16.msra.mxu0 0
    %513 = vmatprep.subr.bf16.mxu0 0
    %514 = vmatpush1.bf16.msra.mxu0 0
    %515 = vmatprep.subr.bf16.mxu0 0
    %516 = vmatpush1.bf16.msra.mxu0 0
    %517 = vmatprep.subr.bf16.mxu0 0
    %518 = vmatpush1.bf16.msra.mxu0 0
    %519 = vmatprep.mubr.bf16.mxu0 0
    %520 = vmatmul.mubr.bf16.gmra.mrb[0].mxu0 %v485
    %v521 = vpop.f32.mrb[0].mxu0
    %v522 = vadd.f32 %v99, %v521
    %v523 = vpop.f32.mrb[0].mxu0
    %v524 = vpop.f32.mrb[0].mxu0
    %v525 = vpop.f32.mrb[0].mxu0
    %526 = vdwg.mxu0
    %v528 = vrot.slane %v522, 5
    %v529 = vrot.slane %v522, 6
    %v532 = vadd.f32 %v86, %v528
    %v533 = vadd.f32 %v89, %v529
    %v534 = vxor.u32 %v532, 2147483648
    %v535 = vxor.u32 %v533, 2147483648
    %v536 = vmul.f32 %v534, 1.442695
    %v537 = vpow.pop %v536
    %v538 = vmul.f32 %v535, 1.442695
    %v539 = vpow.pop %v538
    %v540 = vadd.f32 %v537, 1.0
    %v541 = vadd.f32 %v539, 1.0
    %v542 = vrcp.pop %v540
    %v543 = vmul.f32 1.0, %v542
    %v544 = vrcp.pop %v541
    %v545 = vmul.f32 1.0, %v544
    %546 = vrot.lane.b32.xlu0 %v528, 64
    %v547 = vpop.permute.xlu0 %546
    %548 = vrot.lane.b32.xlu0 %v529, 64
    %v549 = vpop.permute.xlu0 %548
    %v552 = vmul.f32 %v543, %v547
    %v553 = vmul.f32 %v545, %v549
    %556 = vrot.lane.b32.xlu0 %v552, 64
    %v557 = vpop.permute.xlu0 %556
    %558 = vrot.lane.b32.xlu0 %v553, 64
    %v559 = vpop.permute.xlu0 %558
    %v562 = vadd.f32 %v86, %v557
    %v563 = vadd.f32 %v89, %v559
    %v564 = vtanh.pop %v562
    %v565 = vtanh.pop %v563
    %v566 = vsub.f32 1.0, %v543
    %v567 = vsub.f32 1.0, %v545
    %570 = vrot.lane.b32.xlu0 %v564, 96
    %v571 = vpop.permute.xlu0 %570
    %572 = vrot.lane.b32.xlu0 %v565, 96
    %v573 = vpop.permute.xlu0 %572
    %v576 = vmul.f32 %v566, %v571
    %v577 = vmul.f32 %v567, %v573
    %v580 = vrot.slane %v470, 7
    %v581 = vrot.slane %v471, 7
    %v584 = vmul.f32 %v543, %v580
    %v585 = vmul.f32 %v545, %v581
    %v586 = vadd.f32 %v576, %v584
    %v587 = vadd.f32 %v577, %v585
    %v588 = vpack.c.bf16 %v586, %v586
    %v589 = vpack.c.bf16 %v587, %v587
    %v592 = vunpack.c.l.b16 %v588
    %v593 = vunpack.c.l.b16 %v589
    %v594 = vrot.slane %v592, 3
    %v595 = vrot.slane %v593, 2
    %v596 = vsel %vm105, %v595, %v594
    %v597 = vpack.c.b16 %v596, %v596
    %598 = vrot.lane.b32.xlu0 %v597, 96
    %v599 = vpop.permute.xlu0 %598
    %v601 = vsel %vm129, %v599, 0
    %603 = vmatprep.subr.bf16.mxu0 0
    %604 = vmatpush1.bf16.msra.mxu0 %v124
    %605 = vmatprep.subr.bf16.mxu0 0
    %606 = vmatpush1.bf16.msra.mxu0 %v126
    %607 = vmatprep.subr.bf16.mxu0 0
    %608 = vmatpush1.bf16.msra.mxu0 0
    %609 = vmatprep.subr.bf16.mxu0 0
    %610 = vmatpush1.bf16.msra.mxu0 0
    %611 = vmatprep.subr.bf16.mxu0 0
    %612 = vmatpush1.bf16.msra.mxu0 0
    %613 = vmatprep.subr.bf16.mxu0 0
    %614 = vmatpush1.bf16.msra.mxu0 0
    %615 = vmatprep.subr.bf16.mxu0 0
    %616 = vmatpush1.bf16.msra.mxu0 0
    %617 = vmatprep.subr.bf16.mxu0 0
    %618 = vmatpush1.bf16.msra.mxu0 0
    %619 = vmatprep.subr.bf16.mxu0 0
    %620 = vmatpush1.bf16.msra.mxu0 0
    %621 = vmatprep.subr.bf16.mxu0 0
    %622 = vmatpush1.bf16.msra.mxu0 0
    %623 = vmatprep.subr.bf16.mxu0 0
    %624 = vmatpush1.bf16.msra.mxu0 0
    %625 = vmatprep.subr.bf16.mxu0 0
    %626 = vmatpush1.bf16.msra.mxu0 0
    %627 = vmatprep.subr.bf16.mxu0 0
    %628 = vmatpush1.bf16.msra.mxu0 0
    %629 = vmatprep.subr.bf16.mxu0 0
    %630 = vmatpush1.bf16.msra.mxu0 0
    %631 = vmatprep.subr.bf16.mxu0 0
    %632 = vmatpush1.bf16.msra.mxu0 0
    %633 = vmatprep.subr.bf16.mxu0 0
    %634 = vmatpush1.bf16.msra.mxu0 0
    %635 = vmatprep.mubr.bf16.mxu0 0
    %636 = vmatmul.mubr.bf16.gmra.mrb[0].mxu0 %v601
    %v637 = vpop.f32.mrb[0].mxu0
    %v638 = vadd.f32 %v99, %v637
    %v639 = vpop.f32.mrb[0].mxu0
    %v640 = vpop.f32.mrb[0].mxu0
    %v641 = vpop.f32.mrb[0].mxu0
    %642 = vdwg.mxu0
    %v644 = vrot.slane %v638, 4
    %v645 = vrot.slane %v638, 5
    %v648 = vadd.f32 %v86, %v644
    %v649 = vadd.f32 %v89, %v645
    %v650 = vxor.u32 %v648, 2147483648
    %v651 = vxor.u32 %v649, 2147483648
    %v652 = vmul.f32 %v650, 1.442695
    %v653 = vpow.pop %v652
    %v654 = vmul.f32 %v651, 1.442695
    %v655 = vpow.pop %v654
    %v656 = vadd.f32 %v653, 1.0
    %v657 = vadd.f32 %v655, 1.0
    %v658 = vrcp.pop %v656
    %v659 = vmul.f32 1.0, %v658
    %v660 = vrcp.pop %v657
    %v661 = vmul.f32 1.0, %v660
    %662 = vrot.lane.b32.xlu0 %v644, 64
    %v663 = vpop.permute.xlu0 %662
    %664 = vrot.lane.b32.xlu0 %v645, 64
    %v665 = vpop.permute.xlu0 %664
    %v668 = vmul.f32 %v659, %v663
    %v669 = vmul.f32 %v661, %v665
    %672 = vrot.lane.b32.xlu0 %v668, 64
    %v673 = vpop.permute.xlu0 %672
    %674 = vrot.lane.b32.xlu0 %v669, 64
    %v675 = vpop.permute.xlu0 %674
    %v678 = vadd.f32 %v86, %v673
    %v679 = vadd.f32 %v89, %v675
    %v680 = vtanh.pop %v678
    %v681 = vtanh.pop %v679
    %v682 = vsub.f32 1.0, %v659
    %v683 = vsub.f32 1.0, %v661
    %686 = vrot.lane.b32.xlu0 %v680, 96
    %v687 = vpop.permute.xlu0 %686
    %688 = vrot.lane.b32.xlu0 %v681, 96
    %v689 = vpop.permute.xlu0 %688
    %v692 = vmul.f32 %v682, %v687
    %v693 = vmul.f32 %v683, %v689
    %v696 = vrot.slane %v586, 7
    %v697 = vrot.slane %v587, 7
    %v700 = vmul.f32 %v659, %v696
    %v701 = vmul.f32 %v661, %v697
    %v702 = vadd.f32 %v692, %v700
    %v703 = vadd.f32 %v693, %v701
    %v704 = vpack.c.bf16 %v702, %v702
    %v705 = vpack.c.bf16 %v703, %v703
    %v708 = vunpack.c.l.b16 %v704
    %v709 = vunpack.c.l.b16 %v705
    %v710 = vrot.slane %v708, 4
    %v711 = vrot.slane %v709, 3
    %v712 = vsel %vm105, %v711, %v710
    %v713 = vpack.c.b16 %v712, %v712
    %714 = vrot.lane.b32.xlu0 %v713, 96
    %v715 = vpop.permute.xlu0 %714
    %v717 = vsel %vm129, %v715, 0
    %719 = vmatprep.subr.bf16.mxu0 0
    %720 = vmatpush1.bf16.msra.mxu0 %v124
    %721 = vmatprep.subr.bf16.mxu0 0
    %722 = vmatpush1.bf16.msra.mxu0 %v126
    %723 = vmatprep.subr.bf16.mxu0 0
    %724 = vmatpush1.bf16.msra.mxu0 0
    %725 = vmatprep.subr.bf16.mxu0 0
    %726 = vmatpush1.bf16.msra.mxu0 0
    %727 = vmatprep.subr.bf16.mxu0 0
    %728 = vmatpush1.bf16.msra.mxu0 0
    %729 = vmatprep.subr.bf16.mxu0 0
    %730 = vmatpush1.bf16.msra.mxu0 0
    %731 = vmatprep.subr.bf16.mxu0 0
    %732 = vmatpush1.bf16.msra.mxu0 0
    %733 = vmatprep.subr.bf16.mxu0 0
    %734 = vmatpush1.bf16.msra.mxu0 0
    %735 = vmatprep.subr.bf16.mxu0 0
    %736 = vmatpush1.bf16.msra.mxu0 0
    %737 = vmatprep.subr.bf16.mxu0 0
    %738 = vmatpush1.bf16.msra.mxu0 0
    %739 = vmatprep.subr.bf16.mxu0 0
    %740 = vmatpush1.bf16.msra.mxu0 0
    %741 = vmatprep.subr.bf16.mxu0 0
    %742 = vmatpush1.bf16.msra.mxu0 0
    %743 = vmatprep.subr.bf16.mxu0 0
    %744 = vmatpush1.bf16.msra.mxu0 0
    %745 = vmatprep.subr.bf16.mxu0 0
    %746 = vmatpush1.bf16.msra.mxu0 0
    %747 = vmatprep.subr.bf16.mxu0 0
    %748 = vmatpush1.bf16.msra.mxu0 0
    %749 = vmatprep.subr.bf16.mxu0 0
    %750 = vmatpush1.bf16.msra.mxu0 0
    %751 = vmatprep.mubr.bf16.mxu0 0
    %752 = vmatmul.mubr.bf16.gmra.mrb[0].mxu0 %v717
    %v753 = vpop.f32.mrb[0].mxu0
    %v754 = vadd.f32 %v99, %v753
    %v755 = vpop.f32.mrb[0].mxu0
    %v756 = vpop.f32.mrb[0].mxu0
    %v757 = vpop.f32.mrb[0].mxu0
    %758 = vdwg.mxu0
    %v760 = vrot.slane %v754, 3
    %v761 = vrot.slane %v754, 4
    %v764 = vadd.f32 %v86, %v760
    %v765 = vadd.f32 %v89, %v761
    %v766 = vxor.u32 %v764, 2147483648
    %v767 = vxor.u32 %v765, 2147483648
    %v768 = vmul.f32 %v766, 1.442695
    %v769 = vpow.pop %v768
    %v770 = vmul.f32 %v767, 1.442695
    %v771 = vpow.pop %v770
    %v772 = vadd.f32 %v769, 1.0
    %v773 = vadd.f32 %v771, 1.0
    %v774 = vrcp.pop %v772
    %v775 = vmul.f32 1.0, %v774
    %v776 = vrcp.pop %v773
    %v777 = vmul.f32 1.0, %v776
    %778 = vrot.lane.b32.xlu0 %v760, 64
    %v779 = vpop.permute.xlu0 %778
    %780 = vrot.lane.b32.xlu0 %v761, 64
    %v781 = vpop.permute.xlu0 %780
    %v784 = vmul.f32 %v775, %v779
    %v785 = vmul.f32 %v777, %v781
    %788 = vrot.lane.b32.xlu0 %v784, 64
    %v789 = vpop.permute.xlu0 %788
    %790 = vrot.lane.b32.xlu0 %v785, 64
    %v791 = vpop.permute.xlu0 %790
    %v794 = vadd.f32 %v86, %v789
    %v795 = vadd.f32 %v89, %v791
    %v796 = vtanh.pop %v794
    %v797 = vtanh.pop %v795
    %v798 = vsub.f32 1.0, %v775
    %v799 = vsub.f32 1.0, %v777
    %802 = vrot.lane.b32.xlu0 %v796, 96
    %v803 = vpop.permute.xlu0 %802
    %804 = vrot.lane.b32.xlu0 %v797, 96
    %v805 = vpop.permute.xlu0 %804
    %v808 = vmul.f32 %v798, %v803
    %v809 = vmul.f32 %v799, %v805
    %v812 = vrot.slane %v702, 7
    %v813 = vrot.slane %v703, 7
    %v816 = vmul.f32 %v775, %v812
    %v817 = vmul.f32 %v777, %v813
    %v818 = vadd.f32 %v808, %v816
    %v819 = vadd.f32 %v809, %v817
    %v820 = vpack.c.bf16 %v818, %v818
    %v821 = vpack.c.bf16 %v819, %v819
    %v824 = vunpack.c.l.b16 %v820
    %v825 = vunpack.c.l.b16 %v821
    %v826 = vrot.slane %v824, 5
    %v827 = vrot.slane %v825, 4
    %v828 = vsel %vm105, %v827, %v826
    %v829 = vpack.c.b16 %v828, %v828
    %830 = vrot.lane.b32.xlu0 %v829, 96
    %v831 = vpop.permute.xlu0 %830
    %v833 = vsel %vm129, %v831, 0
    %835 = vmatprep.subr.bf16.mxu0 0
    %836 = vmatpush1.bf16.msra.mxu0 %v124
    %837 = vmatprep.subr.bf16.mxu0 0
    %838 = vmatpush1.bf16.msra.mxu0 %v126
    %839 = vmatprep.subr.bf16.mxu0 0
    %840 = vmatpush1.bf16.msra.mxu0 0
    %841 = vmatprep.subr.bf16.mxu0 0
    %842 = vmatpush1.bf16.msra.mxu0 0
    %843 = vmatprep.subr.bf16.mxu0 0
    %844 = vmatpush1.bf16.msra.mxu0 0
    %845 = vmatprep.subr.bf16.mxu0 0
    %846 = vmatpush1.bf16.msra.mxu0 0
    %847 = vmatprep.subr.bf16.mxu0 0
    %848 = vmatpush1.bf16.msra.mxu0 0
    %849 = vmatprep.subr.bf16.mxu0 0
    %850 = vmatpush1.bf16.msra.mxu0 0
    %851 = vmatprep.subr.bf16.mxu0 0
    %852 = vmatpush1.bf16.msra.mxu0 0
    %853 = vmatprep.subr.bf16.mxu0 0
    %854 = vmatpush1.bf16.msra.mxu0 0
    %855 = vmatprep.subr.bf16.mxu0 0
    %856 = vmatpush1.bf16.msra.mxu0 0
    %857 = vmatprep.subr.bf16.mxu0 0
    %858 = vmatpush1.bf16.msra.mxu0 0
    %859 = vmatprep.subr.bf16.mxu0 0
    %860 = vmatpush1.bf16.msra.mxu0 0
    %861 = vmatprep.subr.bf16.mxu0 0
    %862 = vmatpush1.bf16.msra.mxu0 0
    %863 = vmatprep.subr.bf16.mxu0 0
    %864 = vmatpush1.bf16.msra.mxu0 0
    %865 = vmatprep.subr.bf16.mxu0 0
    %866 = vmatpush1.bf16.msra.mxu0 0
    %867 = vmatprep.mubr.bf16.mxu0 0
    %868 = vmatmul.mubr.bf16.gmra.mrb[0].mxu0 %v833
    %v869 = vpop.f32.mrb[0].mxu0
    %v870 = vadd.f32 %v99, %v869
    %v871 = vpop.f32.mrb[0].mxu0
    %v872 = vpop.f32.mrb[0].mxu0
    %v873 = vpop.f32.mrb[0].mxu0
    %874 = vdwg.mxu0
    %v876 = vrot.slane %v870, 2
    %v877 = vrot.slane %v870, 3
    %v880 = vadd.f32 %v86, %v876
    %v881 = vadd.f32 %v89, %v877
    %v882 = vxor.u32 %v880, 2147483648
    %v883 = vxor.u32 %v881, 2147483648
    %v884 = vmul.f32 %v882, 1.442695
    %v885 = vpow.pop %v884
    %v886 = vmul.f32 %v883, 1.442695
    %v887 = vpow.pop %v886
    %v888 = vadd.f32 %v885, 1.0
    %v889 = vadd.f32 %v887, 1.0
    %v890 = vrcp.pop %v888
    %v891 = vmul.f32 1.0, %v890
    %v892 = vrcp.pop %v889
    %v893 = vmul.f32 1.0, %v892
    %894 = vrot.lane.b32.xlu0 %v876, 64
    %v895 = vpop.permute.xlu0 %894
    %896 = vrot.lane.b32.xlu0 %v877, 64
    %v897 = vpop.permute.xlu0 %896
    %v900 = vmul.f32 %v891, %v895
    %v901 = vmul.f32 %v893, %v897
    %904 = vrot.lane.b32.xlu0 %v900, 64
    %v905 = vpop.permute.xlu0 %904
    %906 = vrot.lane.b32.xlu0 %v901, 64
    %v907 = vpop.permute.xlu0 %906
    %v910 = vadd.f32 %v86, %v905
    %v911 = vadd.f32 %v89, %v907
    %v912 = vtanh.pop %v910
    %v913 = vtanh.pop %v911
    %v914 = vsub.f32 1.0, %v891
    %v915 = vsub.f32 1.0, %v893
    %918 = vrot.lane.b32.xlu0 %v912, 96
    %v919 = vpop.permute.xlu0 %918
    %920 = vrot.lane.b32.xlu0 %v913, 96
    %v921 = vpop.permute.xlu0 %920
    %v924 = vmul.f32 %v914, %v919
    %v925 = vmul.f32 %v915, %v921
    %v928 = vrot.slane %v818, 7
    %v929 = vrot.slane %v819, 7
    %v932 = vmul.f32 %v891, %v928
    %v933 = vmul.f32 %v893, %v929
    %v934 = vadd.f32 %v924, %v932
    %v935 = vadd.f32 %v925, %v933
    %v936 = vpack.c.bf16 %v934, %v934
    %v937 = vpack.c.bf16 %v935, %v935
    %v940 = vunpack.c.l.b16 %v936
    %v941 = vunpack.c.l.b16 %v937
    %v942 = vrot.slane %v940, 6
    %v943 = vrot.slane %v941, 5
    %v944 = vsel %vm105, %v943, %v942
    %v945 = vpack.c.b16 %v944, %v944
    %946 = vrot.lane.b32.xlu0 %v945, 96
    %v947 = vpop.permute.xlu0 %946
    %v949 = vsel %vm129, %v947, 0
    %951 = vmatprep.subr.bf16.mxu0 0
    %952 = vmatpush1.bf16.msra.mxu0 %v124
    %953 = vmatprep.subr.bf16.mxu0 0
    %954 = vmatpush1.bf16.msra.mxu0 %v126
    %955 = vmatprep.subr.bf16.mxu0 0
    %956 = vmatpush1.bf16.msra.mxu0 0
    %957 = vmatprep.subr.bf16.mxu0 0
    %958 = vmatpush1.bf16.msra.mxu0 0
    %959 = vmatprep.subr.bf16.mxu0 0
    %960 = vmatpush1.bf16.msra.mxu0 0
    %961 = vmatprep.subr.bf16.mxu0 0
    %962 = vmatpush1.bf16.msra.mxu0 0
    %963 = vmatprep.subr.bf16.mxu0 0
    %964 = vmatpush1.bf16.msra.mxu0 0
    %965 = vmatprep.subr.bf16.mxu0 0
    %966 = vmatpush1.bf16.msra.mxu0 0
    %967 = vmatprep.subr.bf16.mxu0 0
    %968 = vmatpush1.bf16.msra.mxu0 0
    %969 = vmatprep.subr.bf16.mxu0 0
    %970 = vmatpush1.bf16.msra.mxu0 0
    %971 = vmatprep.subr.bf16.mxu0 0
    %972 = vmatpush1.bf16.msra.mxu0 0
    %973 = vmatprep.subr.bf16.mxu0 0
    %974 = vmatpush1.bf16.msra.mxu0 0
    %975 = vmatprep.subr.bf16.mxu0 0
    %976 = vmatpush1.bf16.msra.mxu0 0
    %977 = vmatprep.subr.bf16.mxu0 0
    %978 = vmatpush1.bf16.msra.mxu0 0
    %979 = vmatprep.subr.bf16.mxu0 0
    %980 = vmatpush1.bf16.msra.mxu0 0
    %981 = vmatprep.subr.bf16.mxu0 0
    %982 = vmatpush1.bf16.msra.mxu0 0
    %983 = vmatprep.mubr.bf16.mxu0 0
    %984 = vmatmul.mubr.bf16.gmra.mrb[0].mxu0 %v949
    %v985 = vpop.f32.mrb[0].mxu0
    %v986 = vadd.f32 %v99, %v985
    %v987 = vpop.f32.mrb[0].mxu0
    %v988 = vpop.f32.mrb[0].mxu0
    %v989 = vpop.f32.mrb[0].mxu0
    %990 = vdwg.mxu0
    %v992 = vrot.slane %v986, 1
    %v993 = vrot.slane %v986, 2
    %v996 = vadd.f32 %v86, %v992
    %v997 = vadd.f32 %v89, %v993
    %v998 = vxor.u32 %v996, 2147483648
    %v999 = vxor.u32 %v997, 2147483648
    %v1000 = vmul.f32 %v998, 1.442695
    %v1001 = vpow.pop %v1000
    %v1002 = vmul.f32 %v999, 1.442695
    %v1003 = vpow.pop %v1002
    %v1004 = vadd.f32 %v1001, 1.0
    %v1005 = vadd.f32 %v1003, 1.0
    %v1006 = vrcp.pop %v1004
    %v1007 = vmul.f32 1.0, %v1006
    %v1008 = vrcp.pop %v1005
    %v1009 = vmul.f32 1.0, %v1008
    %1010 = vrot.lane.b32.xlu0 %v992, 64
    %v1011 = vpop.permute.xlu0 %1010
    %1012 = vrot.lane.b32.xlu0 %v993, 64
    %v1013 = vpop.permute.xlu0 %1012
    %v1016 = vmul.f32 %v1007, %v1011
    %v1017 = vmul.f32 %v1009, %v1013
    %1020 = vrot.lane.b32.xlu0 %v1016, 64
    %v1021 = vpop.permute.xlu0 %1020
    %1022 = vrot.lane.b32.xlu0 %v1017, 64
    %v1023 = vpop.permute.xlu0 %1022
    %v1026 = vadd.f32 %v86, %v1021
    %v1027 = vadd.f32 %v89, %v1023
    %v1028 = vtanh.pop %v1026
    %v1029 = vtanh.pop %v1027
    %v1030 = vsub.f32 1.0, %v1007
    %v1031 = vsub.f32 1.0, %v1009
    %1034 = vrot.lane.b32.xlu0 %v1028, 96
    %v1035 = vpop.permute.xlu0 %1034
    %1036 = vrot.lane.b32.xlu0 %v1029, 96
    %v1037 = vpop.permute.xlu0 %1036
    %v1040 = vmul.f32 %v1030, %v1035
    %v1041 = vmul.f32 %v1031, %v1037
    %v1044 = vrot.slane %v934, 7
    %v1045 = vrot.slane %v935, 7
    %v1048 = vmul.f32 %v1007, %v1044
    %v1049 = vmul.f32 %v1009, %v1045
    %v1050 = vadd.f32 %v1040, %v1048
    %v1051 = vadd.f32 %v1041, %v1049
    %vm1052 = vcmask 1040384
    %v1053 = vsel %vm1052, %v241, %v355
    %v1054 = vsel %vm1052, %v242, %v356
    %v1055 = vsel %vm47, %v1053, %v470
    %v1056 = vsel %vm47, %v1054, %v471
    %vm1057 = vcmask 1042432
    %v1058 = vsel %vm1057, %v1055, %v586
    %v1059 = vsel %vm1057, %v1056, %v587
    %vm1060 = vcmask 1043456
    %v1061 = vsel %vm1060, %v1058, %v702
    %v1062 = vsel %vm1060, %v1059, %v703
    %vm1063 = vcmask 1044480
    %v1064 = vsel %vm1063, %v1061, %v818
    %v1065 = vsel %vm1063, %v1062, %v819
    %vm1066 = vcmask 1045504
    %v1067 = vsel %vm1066, %v1064, %v934
    %v1068 = vsel %vm1066, %v1065, %v935
    %vm1069 = vcmask 1046528
    %v1070 = vsel %vm1069, %v1067, %v1050
    %v1071 = vsel %vm1069, %v1068, %v1051
    %v1072 = vld [vmem:[%s3] sm:$0xff]
    %v1073 = vld [vmem:[%s3 + $0x8] sm:$0xff]
    %v1074 = vpack.c.bf16 %v1070, %v1070
    %v1075 = vpack.c.bf16 %v1071, %v1071
    %v1076 = vmul.f32 %v1070, 0.17677669
    %v1077 = vmul.f32 %v1071, 0.17677669
    %v1078 = vpack.c.bf16 %v1076, %v1076
    %v1079 = vpack.c.bf16 %v1077, %v1077
    %1081 = vrot.lane.b32.xlu0 %v1078, 96
    %v1082 = vpop.permute.xlu0 %1081
    %1084 = vrot.lane.b32.xlu0 %v1074, 96
    %v1085 = vpop.permute.xlu0 %1084
    %v1087 = vsel %vm129, %v1082, 0
    %v1090 = vsel %vm129, %v1085, 0
    %1092 = vmatprep.subr.bf16.mxu0 0
    %1093 = vmatpush1.bf16.xpose.msra.mxu0 %v1090
    %1094 = vmatprep.subr.bf16.mxu0 0
    %1095 = vmatpush1.bf16.xpose.msra.mxu0 0
    %1096 = vmatprep.subr.bf16.mxu0 0
    %1097 = vmatpush1.bf16.xpose.msra.mxu0 0
    %1098 = vmatprep.subr.bf16.mxu0 0
    %1099 = vmatpush1.bf16.xpose.msra.mxu0 0
    %1100 = vmatprep.subr.bf16.mxu0 0
    %1101 = vmatpush1.bf16.xpose.msra.mxu0 0
    %1102 = vmatprep.subr.bf16.mxu0 0
    %1103 = vmatpush1.bf16.xpose.msra.mxu0 0
    %1104 = vmatprep.subr.bf16.mxu0 0
    %1105 = vmatpush1.bf16.xpose.msra.mxu0 0
    %1106 = vmatprep.subr.bf16.mxu0 0
    %1107 = vmatpush1.bf16.xpose.msra.mxu0 0
    %1108 = vmatprep.subr.bf16.mxu0 0
    %1109 = vmatpush1.bf16.xpose.msra.mxu0 0
    %1110 = vmatprep.subr.bf16.mxu0 0
    %1111 = vmatpush1.bf16.xpose.msra.mxu0 0
    %1112 = vmatprep.subr.bf16.mxu0 0
    %1113 = vmatpush1.bf16.xpose.msra.mxu0 0
    %1114 = vmatprep.subr.bf16.mxu0 0
    %1115 = vmatpush1.bf16.xpose.msra.mxu0 0
    %1116 = vmatprep.subr.bf16.mxu0 0
    %1117 = vmatpush1.bf16.xpose.msra.mxu0 0
    %1118 = vmatprep.subr.bf16.mxu0 0
    %1119 = vmatpush1.bf16.xpose.msra.mxu0 0
    %1120 = vmatprep.subr.bf16.mxu0 0
    %1121 = vmatpush1.bf16.xpose.msra.mxu0 0
    %1122 = vmatprep.subr.bf16.mxu0 0
    %1123 = vmatpush1.bf16.xpose.msra.mxu0 0
    %1124 = vmatprep.mubr.bf16.mxu0 0
    %1125 = vmatmul.mubr.bf16.gmra.mrb[0].mxu0 %v1087
    %v1126 = vpop.f32.mrb[0].mxu0
    %v1127 = vadd.f32 %v1072, %v1126
    %v1128 = vpop.f32.mrb[0].mxu0
    %v1129 = vpop.f32.mrb[0].mxu0
    %v1130 = vpop.f32.mrb[0].mxu0
    %1131 = vdwg.mxu0
    %1133 = vrot.lane.b32.xlu0 %v1079, 96
    %v1134 = vpop.permute.xlu0 %1133
    %1136 = vrot.lane.b32.xlu0 %v1075, 96
    %v1137 = vpop.permute.xlu0 %1136
    %v1139 = vsel %vm129, %v1134, 0
    %v1142 = vsel %vm129, %v1137, 0
    %1144 = vmatprep.subr.bf16.mxu0 0
    %1145 = vmatpush1.bf16.xpose.msra.mxu0 %v1142
    %1146 = vmatprep.subr.bf16.mxu0 0
    %1147 = vmatpush1.bf16.xpose.msra.mxu0 0
    %1148 = vmatprep.subr.bf16.mxu0 0
    %1149 = vmatpush1.bf16.xpose.msra.mxu0 0
    %1150 = vmatprep.subr.bf16.mxu0 0
    %1151 = vmatpush1.bf16.xpose.msra.mxu0 0
    %1152 = vmatprep.subr.bf16.mxu0 0
    %1153 = vmatpush1.bf16.xpose.msra.mxu0 0
    %1154 = vmatprep.subr.bf16.mxu0 0
    %1155 = vmatpush1.bf16.xpose.msra.mxu0 0
    %1156 = vmatprep.subr.bf16.mxu0 0
    %1157 = vmatpush1.bf16.xpose.msra.mxu0 0
    %1158 = vmatprep.subr.bf16.mxu0 0
    %1159 = vmatpush1.bf16.xpose.msra.mxu0 0
    %1160 = vmatprep.subr.bf16.mxu0 0
    %1161 = vmatpush1.bf16.xpose.msra.mxu0 0
    %1162 = vmatprep.subr.bf16.mxu0 0
    %1163 = vmatpush1.bf16.xpose.msra.mxu0 0
    %1164 = vmatprep.subr.bf16.mxu0 0
    %1165 = vmatpush1.bf16.xpose.msra.mxu0 0
    %1166 = vmatprep.subr.bf16.mxu0 0
    %1167 = vmatpush1.bf16.xpose.msra.mxu0 0
    %1168 = vmatprep.subr.bf16.mxu0 0
    %1169 = vmatpush1.bf16.xpose.msra.mxu0 0
    %1170 = vmatprep.subr.bf16.mxu0 0
    %1171 = vmatpush1.bf16.xpose.msra.mxu0 0
    %1172 = vmatprep.subr.bf16.mxu0 0
    %1173 = vmatpush1.bf16.xpose.msra.mxu0 0
    %1174 = vmatprep.subr.bf16.mxu0 0
    %1175 = vmatpush1.bf16.xpose.msra.mxu0 0
    %1176 = vmatprep.mubr.bf16.mxu0 0
    %1177 = vmatmul.mubr.bf16.gmra.mrb[0].mxu0 %v1139
    %v1178 = vpop.f32.mrb[0].mxu0
    %v1179 = vadd.f32 %v1073, %v1178
    %v1180 = vpop.f32.mrb[0].mxu0
    %v1181 = vpop.f32.mrb[0].mxu0
    %v1182 = vpop.f32.mrb[0].mxu0
    %1183 = vdwg.mxu0
    %vm1184 = vcmask 64512
    %v1185 = vsel %vm1184, %v1127, -inf
    %1186 = vmax.xlane.f32.xlu0 %v1185
    %v1187 = vpop.xlane.xlu0 %1186
    %v1188 = vsel %vm1184, %v1179, -inf
    %1189 = vmax.xlane.f32.xlu0 %v1188
    %v1190 = vpop.xlane.xlu0 %1189
    %v1191 = vsub.f32 %v1127, %v1187
    %v1192 = vsub.f32 %v1179, %v1190
    %v1193 = vmul.f32 %v1191, 1.442695
    %v1194 = vpow.pop %v1193
    %v1195 = vmul.f32 %v1192, 1.442695
    %v1196 = vpow.pop %v1195
    %v1197 = vsel %vm1184, %v1194, 0.0
    %1198 = vadd.xlane.f32.xlu0 %v1197
    %v1199 = vpop.xlane.xlu0 %1198
    %v1200 = vsel %vm1184, %v1196, 0.0
    %1201 = vadd.xlane.f32.xlu0 %v1200
    %v1202 = vpop.xlane.xlu0 %1201
    %v1203 = vrcp.pop %v1199
    %v1204 = vrcp.pop %v1202
    %v1205 = vmul.f32 %v1194, %v1203
    %v1206 = vmul.f32 %v1196, %v1204
    %v1207 = vpack.c.bf16 %v1205, %v1205
    %v1208 = vpack.c.bf16 %v1206, %v1206
    %v1210 = vsel %vm1184, %v1207, 0
    %v1212 = vsel %vm1060, %v1085, 0
    %1214 = vmatprep.subr.bf16.mxu0 0
    %1215 = vmatpush1.bf16.msra.mxu0 %v1212
    %1216 = vmatprep.subr.bf16.mxu0 0
    %1217 = vmatpush1.bf16.msra.mxu0 0
    %1218 = vmatprep.subr.bf16.mxu0 0
    %1219 = vmatpush1.bf16.msra.mxu0 0
    %1220 = vmatprep.subr.bf16.mxu0 0
    %1221 = vmatpush1.bf16.msra.mxu0 0
    %1222 = vmatprep.subr.bf16.mxu0 0
    %1223 = vmatpush1.bf16.msra.mxu0 0
    %1224 = vmatprep.subr.bf16.mxu0 0
    %1225 = vmatpush1.bf16.msra.mxu0 0
    %1226 = vmatprep.subr.bf16.mxu0 0
    %1227 = vmatpush1.bf16.msra.mxu0 0
    %1228 = vmatprep.subr.bf16.mxu0 0
    %1229 = vmatpush1.bf16.msra.mxu0 0
    %1230 = vmatprep.subr.bf16.mxu0 0
    %1231 = vmatpush1.bf16.msra.mxu0 0
    %1232 = vmatprep.subr.bf16.mxu0 0
    %1233 = vmatpush1.bf16.msra.mxu0 0
    %1234 = vmatprep.subr.bf16.mxu0 0
    %1235 = vmatpush1.bf16.msra.mxu0 0
    %1236 = vmatprep.subr.bf16.mxu0 0
    %1237 = vmatpush1.bf16.msra.mxu0 0
    %1238 = vmatprep.subr.bf16.mxu0 0
    %1239 = vmatpush1.bf16.msra.mxu0 0
    %1240 = vmatprep.subr.bf16.mxu0 0
    %1241 = vmatpush1.bf16.msra.mxu0 0
    %1242 = vmatprep.subr.bf16.mxu0 0
    %1243 = vmatpush1.bf16.msra.mxu0 0
    %1244 = vmatprep.subr.bf16.mxu0 0
    %1245 = vmatpush1.bf16.msra.mxu0 0
    %1246 = vmatprep.mubr.bf16.mxu0 0
    %1247 = vmatmul.mubr.bf16.gmra.mrb[0].mxu0 %v1210
    %v1248 = vpop.f32.mrb[0].mxu0
    %v1249 = vadd.f32 0.0, %v1248
    %v1250 = vpop.f32.mrb[0].mxu0
    %v1251 = vpop.f32.mrb[0].mxu0
    %v1252 = vpop.f32.mrb[0].mxu0
    %1253 = vdwg.mxu0
    %v1255 = vsel %vm1184, %v1208, 0
    %v1257 = vsel %vm1060, %v1137, 0
    %1259 = vmatprep.subr.bf16.mxu0 0
    %1260 = vmatpush1.bf16.msra.mxu0 %v1257
    %1261 = vmatprep.subr.bf16.mxu0 0
    %1262 = vmatpush1.bf16.msra.mxu0 0
    %1263 = vmatprep.subr.bf16.mxu0 0
    %1264 = vmatpush1.bf16.msra.mxu0 0
    %1265 = vmatprep.subr.bf16.mxu0 0
    %1266 = vmatpush1.bf16.msra.mxu0 0
    %1267 = vmatprep.subr.bf16.mxu0 0
    %1268 = vmatpush1.bf16.msra.mxu0 0
    %1269 = vmatprep.subr.bf16.mxu0 0
    %1270 = vmatpush1.bf16.msra.mxu0 0
    %1271 = vmatprep.subr.bf16.mxu0 0
    %1272 = vmatpush1.bf16.msra.mxu0 0
    %1273 = vmatprep.subr.bf16.mxu0 0
    %1274 = vmatpush1.bf16.msra.mxu0 0
    %1275 = vmatprep.subr.bf16.mxu0 0
    %1276 = vmatpush1.bf16.msra.mxu0 0
    %1277 = vmatprep.subr.bf16.mxu0 0
    %1278 = vmatpush1.bf16.msra.mxu0 0
    %1279 = vmatprep.subr.bf16.mxu0 0
    %1280 = vmatpush1.bf16.msra.mxu0 0
    %1281 = vmatprep.subr.bf16.mxu0 0
    %1282 = vmatpush1.bf16.msra.mxu0 0
    %1283 = vmatprep.subr.bf16.mxu0 0
    %1284 = vmatpush1.bf16.msra.mxu0 0
    %1285 = vmatprep.subr.bf16.mxu0 0
    %1286 = vmatpush1.bf16.msra.mxu0 0
    %1287 = vmatprep.subr.bf16.mxu0 0
    %1288 = vmatpush1.bf16.msra.mxu0 0
    %1289 = vmatprep.subr.bf16.mxu0 0
    %1290 = vmatpush1.bf16.msra.mxu0 0
    %1291 = vmatprep.mubr.bf16.mxu0 0
    %1292 = vmatmul.mubr.bf16.gmra.mrb[0].mxu0 %v1255
    %v1293 = vpop.f32.mrb[0].mxu0
    %v1294 = vadd.f32 0.0, %v1293
    %v1295 = vpop.f32.mrb[0].mxu0
    %v1296 = vpop.f32.mrb[0].mxu0
    %v1297 = vpop.f32.mrb[0].mxu0
    %1298 = vdwg.mxu0
    %v1299 = vld [vmem:[%s2] sm:$0xf]
    %v1300 = vld [vmem:[%s2 + $0x4] sm:$0xf]
    %v1301 = vmul.f32 %v1249, 0.17677669
    %v1302 = vmul.f32 %v1294, 0.17677669
    %v1303 = vpack.c.bf16 %v1301, %v1301
    %v1304 = vpack.c.bf16 %v1302, %v1302
    %1306 = vrot.lane.b32.xlu0 %v1072, 120
    %v1307 = vpop.permute.xlu0 %1306
    %v1310 = vsel %vm129, %v1303, 0
    %v1313 = vsel %vm129, %v1299, 0
    %1315 = vmatprep.subr.bf16.mxu0 0
    %1316 = vmatpush1.bf16.xpose.msra.mxu0 %v1313
    %1317 = vmatprep.subr.bf16.mxu0 0
    %1318 = vmatpush1.bf16.xpose.msra.mxu0 0
    %1319 = vmatprep.subr.bf16.mxu0 0
    %1320 = vmatpush1.bf16.xpose.msra.mxu0 0
    %1321 = vmatprep.subr.bf16.mxu0 0
    %1322 = vmatpush1.bf16.xpose.msra.mxu0 0
    %1323 = vmatprep.subr.bf16.mxu0 0
    %1324 = vmatpush1.bf16.xpose.msra.mxu0 0
    %1325 = vmatprep.subr.bf16.mxu0 0
    %1326 = vmatpush1.bf16.xpose.msra.mxu0 0
    %1327 = vmatprep.subr.bf16.mxu0 0
    %1328 = vmatpush1.bf16.xpose.msra.mxu0 0
    %1329 = vmatprep.subr.bf16.mxu0 0
    %1330 = vmatpush1.bf16.xpose.msra.mxu0 0
    %1331 = vmatprep.subr.bf16.mxu0 0
    %1332 = vmatpush1.bf16.xpose.msra.mxu0 0
    %1333 = vmatprep.subr.bf16.mxu0 0
    %1334 = vmatpush1.bf16.xpose.msra.mxu0 0
    %1335 = vmatprep.subr.bf16.mxu0 0
    %1336 = vmatpush1.bf16.xpose.msra.mxu0 0
    %1337 = vmatprep.subr.bf16.mxu0 0
    %1338 = vmatpush1.bf16.xpose.msra.mxu0 0
    %1339 = vmatprep.subr.bf16.mxu0 0
    %1340 = vmatpush1.bf16.xpose.msra.mxu0 0
    %1341 = vmatprep.subr.bf16.mxu0 0
    %1342 = vmatpush1.bf16.xpose.msra.mxu0 0
    %1343 = vmatprep.subr.bf16.mxu0 0
    %1344 = vmatpush1.bf16.xpose.msra.mxu0 0
    %1345 = vmatprep.subr.bf16.mxu0 0
    %1346 = vmatpush1.bf16.xpose.msra.mxu0 0
    %1347 = vmatprep.mubr.bf16.mxu0 0
    %1348 = vmatmul.mubr.bf16.gmra.mrb[0].mxu0 %v1310
    %v1349 = vpop.f32.mrb[0].mxu0
    %v1350 = vadd.f32 %v1307, %v1349
    %v1351 = vpop.f32.mrb[0].mxu0
    %v1352 = vpop.f32.mrb[0].mxu0
    %v1353 = vpop.f32.mrb[0].mxu0
    %1354 = vdwg.mxu0
    %1356 = vrot.lane.b32.xlu0 %v1073, 120
    %v1357 = vpop.permute.xlu0 %1356
    %v1360 = vsel %vm129, %v1304, 0
    %v1363 = vsel %vm129, %v1300, 0
    %1365 = vmatprep.subr.bf16.mxu0 0
    %1366 = vmatpush1.bf16.xpose.msra.mxu0 %v1363
    %1367 = vmatprep.subr.bf16.mxu0 0
    %1368 = vmatpush1.bf16.xpose.msra.mxu0 0
    %1369 = vmatprep.subr.bf16.mxu0 0
    %1370 = vmatpush1.bf16.xpose.msra.mxu0 0
    %1371 = vmatprep.subr.bf16.mxu0 0
    %1372 = vmatpush1.bf16.xpose.msra.mxu0 0
    %1373 = vmatprep.subr.bf16.mxu0 0
    %1374 = vmatpush1.bf16.xpose.msra.mxu0 0
    %1375 = vmatprep.subr.bf16.mxu0 0
    %1376 = vmatpush1.bf16.xpose.msra.mxu0 0
    %1377 = vmatprep.subr.bf16.mxu0 0
    %1378 = vmatpush1.bf16.xpose.msra.mxu0 0
    %1379 = vmatprep.subr.bf16.mxu0 0
    %1380 = vmatpush1.bf16.xpose.msra.mxu0 0
    %1381 = vmatprep.subr.bf16.mxu0 0
    %1382 = vmatpush1.bf16.xpose.msra.mxu0 0
    %1383 = vmatprep.subr.bf16.mxu0 0
    %1384 = vmatpush1.bf16.xpose.msra.mxu0 0
    %1385 = vmatprep.subr.bf16.mxu0 0
    %1386 = vmatpush1.bf16.xpose.msra.mxu0 0
    %1387 = vmatprep.subr.bf16.mxu0 0
    %1388 = vmatpush1.bf16.xpose.msra.mxu0 0
    %1389 = vmatprep.subr.bf16.mxu0 0
    %1390 = vmatpush1.bf16.xpose.msra.mxu0 0
    %1391 = vmatprep.subr.bf16.mxu0 0
    %1392 = vmatpush1.bf16.xpose.msra.mxu0 0
    %1393 = vmatprep.subr.bf16.mxu0 0
    %1394 = vmatpush1.bf16.xpose.msra.mxu0 0
    %1395 = vmatprep.subr.bf16.mxu0 0
    %1396 = vmatpush1.bf16.xpose.msra.mxu0 0
    %1397 = vmatprep.mubr.bf16.mxu0 0
    %1398 = vmatmul.mubr.bf16.gmra.mrb[0].mxu0 %v1360
    %v1399 = vpop.f32.mrb[0].mxu0
    %v1400 = vadd.f32 %v1357, %v1399
    %v1401 = vpop.f32.mrb[0].mxu0
    %v1402 = vpop.f32.mrb[0].mxu0
    %v1403 = vpop.f32.mrb[0].mxu0
    %1404 = vdwg.mxu0
    %v1405 = vsel %vm1184, %v1350, -inf
    %1406 = vmax.xlane.f32.xlu0 %v1405
    %v1407 = vpop.xlane.xlu0 %1406
    %v1408 = vsel %vm1184, %v1400, -inf
    %1409 = vmax.xlane.f32.xlu0 %v1408
    %v1410 = vpop.xlane.xlu0 %1409
    %v1411 = vsub.f32 %v1350, %v1407
    %v1412 = vsub.f32 %v1400, %v1410
    %v1413 = vmul.f32 %v1411, 1.442695
    %v1414 = vpow.pop %v1413
    %v1415 = vmul.f32 %v1412, 1.442695
    %v1416 = vpow.pop %v1415
    %v1417 = vsel %vm1184, %v1414, 0.0
    %1418 = vadd.xlane.f32.xlu0 %v1417
    %v1419 = vpop.xlane.xlu0 %1418
    %v1420 = vsel %vm1184, %v1416, 0.0
    %1421 = vadd.xlane.f32.xlu0 %v1420
    %v1422 = vpop.xlane.xlu0 %1421
    %v1423 = vrcp.pop %v1419
    %v1424 = vrcp.pop %v1422
    %v1425 = vmul.f32 %v1414, %v1423
    %v1426 = vmul.f32 %v1416, %v1424
    %v1427 = vpack.c.bf16 %v1425, %v1425
    %v1428 = vpack.c.bf16 %v1426, %v1426
    %v1430 = vsel %vm1184, %v1427, 0
    %v1432 = vsel %vm1060, %v1299, 0
    %1434 = vmatprep.subr.bf16.mxu0 0
    %1435 = vmatpush1.bf16.msra.mxu0 %v1432
    %1436 = vmatprep.subr.bf16.mxu0 0
    %1437 = vmatpush1.bf16.msra.mxu0 0
    %1438 = vmatprep.subr.bf16.mxu0 0
    %1439 = vmatpush1.bf16.msra.mxu0 0
    %1440 = vmatprep.subr.bf16.mxu0 0
    %1441 = vmatpush1.bf16.msra.mxu0 0
    %1442 = vmatprep.subr.bf16.mxu0 0
    %1443 = vmatpush1.bf16.msra.mxu0 0
    %1444 = vmatprep.subr.bf16.mxu0 0
    %1445 = vmatpush1.bf16.msra.mxu0 0
    %1446 = vmatprep.subr.bf16.mxu0 0
    %1447 = vmatpush1.bf16.msra.mxu0 0
    %1448 = vmatprep.subr.bf16.mxu0 0
    %1449 = vmatpush1.bf16.msra.mxu0 0
    %1450 = vmatprep.subr.bf16.mxu0 0
    %1451 = vmatpush1.bf16.msra.mxu0 0
    %1452 = vmatprep.subr.bf16.mxu0 0
    %1453 = vmatpush1.bf16.msra.mxu0 0
    %1454 = vmatprep.subr.bf16.mxu0 0
    %1455 = vmatpush1.bf16.msra.mxu0 0
    %1456 = vmatprep.subr.bf16.mxu0 0
    %1457 = vmatpush1.bf16.msra.mxu0 0
    %1458 = vmatprep.subr.bf16.mxu0 0
    %1459 = vmatpush1.bf16.msra.mxu0 0
    %1460 = vmatprep.subr.bf16.mxu0 0
    %1461 = vmatpush1.bf16.msra.mxu0 0
    %1462 = vmatprep.subr.bf16.mxu0 0
    %1463 = vmatpush1.bf16.msra.mxu0 0
    %1464 = vmatprep.subr.bf16.mxu0 0
    %1465 = vmatpush1.bf16.msra.mxu0 0
    %1466 = vmatprep.mubr.bf16.mxu0 0
    %1467 = vmatmul.mubr.bf16.gmra.mrb[0].mxu0 %v1430
    %v1468 = vpop.f32.mrb[0].mxu0
    %v1469 = vadd.f32 0.0, %v1468
    %v1470 = vpop.f32.mrb[0].mxu0
    %v1471 = vpop.f32.mrb[0].mxu0
    %v1472 = vpop.f32.mrb[0].mxu0
    %1473 = vdwg.mxu0
    %v1475 = vsel %vm1184, %v1428, 0
    %v1477 = vsel %vm1060, %v1300, 0
    %1479 = vmatprep.subr.bf16.mxu0 0
    %1480 = vmatpush1.bf16.msra.mxu0 %v1477
    %1481 = vmatprep.subr.bf16.mxu0 0
    %1482 = vmatpush1.bf16.msra.mxu0 0
    %1483 = vmatprep.subr.bf16.mxu0 0
    %1484 = vmatpush1.bf16.msra.mxu0 0
    %1485 = vmatprep.subr.bf16.mxu0 0
    %1486 = vmatpush1.bf16.msra.mxu0 0
    %1487 = vmatprep.subr.bf16.mxu0 0
    %1488 = vmatpush1.bf16.msra.mxu0 0
    %1489 = vmatprep.subr.bf16.mxu0 0
    %1490 = vmatpush1.bf16.msra.mxu0 0
    %1491 = vmatprep.subr.bf16.mxu0 0
    %1492 = vmatpush1.bf16.msra.mxu0 0
    %1493 = vmatprep.subr.bf16.mxu0 0
    %1494 = vmatpush1.bf16.msra.mxu0 0
    %1495 = vmatprep.subr.bf16.mxu0 0
    %1496 = vmatpush1.bf16.msra.mxu0 0
    %1497 = vmatprep.subr.bf16.mxu0 0
    %1498 = vmatpush1.bf16.msra.mxu0 0
    %1499 = vmatprep.subr.bf16.mxu0 0
    %1500 = vmatpush1.bf16.msra.mxu0 0
    %1501 = vmatprep.subr.bf16.mxu0 0
    %1502 = vmatpush1.bf16.msra.mxu0 0
    %1503 = vmatprep.subr.bf16.mxu0 0
    %1504 = vmatpush1.bf16.msra.mxu0 0
    %1505 = vmatprep.subr.bf16.mxu0 0
    %1506 = vmatpush1.bf16.msra.mxu0 0
    %1507 = vmatprep.subr.bf16.mxu0 0
    %1508 = vmatpush1.bf16.msra.mxu0 0
    %1509 = vmatprep.subr.bf16.mxu0 0
    %1510 = vmatpush1.bf16.msra.mxu0 0
    %1511 = vmatprep.mubr.bf16.mxu0 0
    %1512 = vmatmul.mubr.bf16.gmra.mrb[0].mxu0 %v1475
    %v1513 = vpop.f32.mrb[0].mxu0
    %v1514 = vadd.f32 0.0, %v1513
    %v1515 = vpop.f32.mrb[0].mxu0
    %v1516 = vpop.f32.mrb[0].mxu0
    %v1517 = vpop.f32.mrb[0].mxu0
    %1518 = vdwg.mxu0
    %1519 = vst.msk [vmem:[#allocation2] sm:$0xff] %vm129, %v1469
    %1520 = vst.msk [vmem:[#allocation2 + $0x8] sm:$0xff] %vm129, %v1514
    // Predicated region
    $region26: #{attention_decoder_layer.1} parent=1 // pred_check
      _
    $region27: #{attention_decoder_layer.1} parent=1 // pred_check_branch
      %1522 = sbr.rel (0) target = $region29
    $region28: #{attention_decoder_layer.1} parent=1 // pred_region
      %s1524 = ssub.s32 256, 256
      %1525 = vsyncadd [#allocation3], %s1524
      %s1526 = sshll.u32 [#allocation2], 4
      %s1527 = int_to_ptr.vmem [resolvable:$true] %s1526
      %1532 = dma.vmem_to_hbm [thread:$0]  %s1527, 256, %s6, [#allocation3], 128, 128, 8
    $region29: #{attention_decoder_layer.1} parent=1 // pred_fallthru
      _
    // Predicated region
    $region30: #{attention_decoder_layer.1} parent=1 // pred_check
      _
    $region31: #{attention_decoder_layer.1} parent=1 // pred_check_branch
      %1534 = sbr.rel (0) target = $region33
    $region32: #{attention_decoder_layer.1} parent=1 // pred_region
      %1535 = dma.done [#allocation3], 256
    $region33: #{attention_decoder_layer.1} parent=1 // pred_fallthru
      _
    %1536 = vsyncpa [#allocation3], 1

</llo_original>
